<compile_context>
chip_gen: v7x
topology: tpu7x:2x2x1
jax: 0.10.0
libtpu: 0.0.40
codegen_flags: <defaults>
</compile_context>

<pallas_src>
import jax
import jax.numpy as jnp
import numpy as np
from jax.experimental import pallas as pl
from jax.experimental.pallas import tpu as pltpu

# ----------------------- small, self-consistent shapes -----------------------
N, C, T, V = 2, 4, 8, 16      # batch, in_channels, frames, GAT feature dim
F_OUT = 32                    # out_channels
NN = C * T                    # number of GAT nodes (= S*T in the module)
K = 9                         # unit_tcn temporal kernel size
PAD = (K - 1) // 2
ALPHA = 0.01                  # LeakyReLU slope
BN_EPS = 1e-5
# NOTE: STGATBlock builds the GAT with in_feature = A.size * in_channels and the
# GAT forward requires in_feature == V, so shapes are chosen with A.size * C == V.


# ------------------------------ fused block kernel ----------------------------
def _stgat_kernel(h_ref, adj_ref, wext_ref, wbext_ref, wk_ref, bias_ref,
                  out_ref, ypad_ref):
    # Per grid step (= one batch element):
    #   h_ref    (1, NN, V)      adj_ref (NN, NN)
    #   wext_ref (V, F+2)        Wlinear weight^T with W^T@ai^T, W^T@aj^T columns
    #   wbext_ref(1, F+2)        Wlinear bias with ai/aj biases folded in
    #   wk_ref   (K, F, F)       per-tap conv weight, BN scale folded in
    #   bias_ref (F, 1)          conv bias + BN shift folded
    #   out_ref  (1, F, NN)      ypad_ref VMEM scratch (F, NN + K - 1)
    f = wk_ref.shape[1]
    nn = out_ref.shape[2]
    k_taps = wk_ref.shape[0]
    pad = (k_taps - 1) // 2

    # ------------------ GraphAttentionLayer (eval: dropout = id) ------------------
    # One MXU matmul yields Wh AND both attention projections (extra columns),
    # so no cross-lane reductions and no broadcast-multiplies are needed.
    h = h_ref[0]                                                     # (NN, V)
    wh_ext = jnp.dot(h, wext_ref[...],
                     preferred_element_type=jnp.float32) + wbext_ref[...]
    wh = wh_ext[:, :f]                                               # (NN, F)
    wh1 = wh_ext[:, f:f + 1]                                         # (NN, 1) ai proj
    wh2 = wh_ext[:, f + 1:f + 2]                                     # (NN, 1) aj proj
    e = wh1 + jnp.transpose(wh2)                                     # (NN, NN)
    e = jnp.where(e > 0, e, ALPHA * e)                               # LeakyReLU
    logits = jnp.where(adj_ref[...] > 0, e, -1e9)                    # adjacency mask
    logits = logits - jnp.max(logits, axis=-1, keepdims=True)        # softmax dim=2
    p = jnp.exp(logits)
    att = p * pl.reciprocal(jnp.sum(p, axis=-1, keepdims=True), approx=True)
    hh = jnp.dot(att, wh, preferred_element_type=jnp.float32)        # (NN, F)
    # ELU (concat=True); min() keeps exp() finite for the unselected positive branch
    hh = jnp.where(hh > 0, hh, jnp.exp(jnp.minimum(hh, 0.0)) - 1.0)

    # ---------- unit_tcn Conv2d(9,1) + BatchNorm2d(eval) + ReLU (all folded) ----------
    # Zero ONLY the 2*pad pad lanes of the persistent scratch; unconditional per
    # step because with a "parallel" grid each core has its own (uninitialized)
    # scratch and may never run program_id == 0.
    ypad_ref[:, :pad] = jnp.zeros((f, pad), jnp.float32)
    ypad_ref[:, pad + nn:pad + nn + pad] = jnp.zeros((f, pad), jnp.float32)
    ypad_ref[:, pad:pad + nn] = jnp.transpose(hh)                    # (F, NN) slab
    # K-tap accumulate matmuls straight off the padded slab: no im2col / ycol
    # materialization, no concatenate.  Free in-place accumulation on v7x (MRB).
    acc = bias_ref[...] + jnp.dot(wk_ref[0], ypad_ref[:, 0:nn],
                                  preferred_element_type=jnp.float32)
    for k in range(1, k_taps):
        acc = acc + jnp.dot(wk_ref[k], ypad_ref[:, k:k + nn],
                            preferred_element_type=jnp.float32)
    out_ref[0] = jnp.maximum(acc, 0.0)                               # + res(=0), ReLU


# ------------------------------- full forward --------------------------------
def stgat_block_forward(x, adj, params):
    n, c, t, v = x.shape
    nn = c * t
    f = params["w_t"].shape[1]
    k_taps = params["conv_w_k"].shape[0]
    h = x.reshape(n, nn, v)                                          # h.view(B, S*T, V)

    # Fold ai/aj projections into the Wlinear matmul (two extra weight columns,
    # their scalar biases folded into the extended bias row).
    ai = params["ai_w"].reshape(-1)
    aj = params["aj_w"].reshape(-1)
    w_ext = jnp.concatenate(
        [params["w_t"], params["w_t"] @ ai[:, None], params["w_t"] @ aj[:, None]],
        axis=1)                                                              # (V, F+2)
    c_i = params["w_b"] @ ai + params["ai_b"]
    c_j = params["w_b"] @ aj + params["aj_b"]
    wb_ext = jnp.concatenate(
        [params["w_b"], jnp.stack([c_i, c_j])]).reshape(1, f + 2)            # (1, F+2)

    # Fold conv bias + BatchNorm (eval) into the per-tap weights / one bias vector.
    scale = params["bn_g"] / jnp.sqrt(params["bn_v"] + BN_EPS)               # (F,)
    bias = params["conv_b"] * scale + params["bn_b"] - params["bn_m"] * scale
    wk = params["conv_w_k"] * scale[None, :, None]                           # (K, F, F)

    out = pl.pallas_call(
        _stgat_kernel,
        out_shape=jax.ShapeDtypeStruct((n, f, nn), jnp.float32),
        grid=(n,),
        in_specs=[
            pl.BlockSpec((1, nn, v), lambda i: (i, 0, 0)),           # x (per batch)
            pl.BlockSpec((nn, nn), lambda i: (0, 0)),                # adj
            pl.BlockSpec((v, f + 2), lambda i: (0, 0)),              # extended weight
            pl.BlockSpec((1, f + 2), lambda i: (0, 0)),              # extended bias
            pl.BlockSpec((k_taps, f, f), lambda i: (0, 0, 0)),       # folded conv taps
            pl.BlockSpec((f, 1), lambda i: (0, 0)),                  # folded conv/BN bias
        ],
        out_specs=pl.BlockSpec((1, f, nn), lambda i: (i, 0, 0)),
        scratch_shapes=[pltpu.VMEM((f, nn + k_taps - 1), jnp.float32)],
        compiler_params=pltpu.CompilerParams(
            dimension_semantics=("parallel",)),                      # 1 batch / TC on v7x
    )(h, adj, w_ext, wb_ext, wk, bias.reshape(f, 1))
    return out[..., None]                                            # NCHW (N, F, NN, 1)


# ------------------------------ plain-JAX reference ---------------------------
def reference_forward(x, adj, p):
    n, c, t, v = x.shape
    h = x.reshape(n, c * t, v)
    wh = h @ p["w_t"] + p["w_b"]
    wh1 = wh @ p["ai_w"].reshape(-1, 1) + p["ai_b"]
    wh2 = wh @ p["aj_w"].reshape(-1, 1) + p["aj_b"]
    e = wh1 + jnp.swapaxes(wh2, 1, 2)
    e = jnp.where(e > 0, e, ALPHA * e)
    att = jax.nn.softmax(jnp.where(adj > 0, e, -1e9), axis=2)
    hh = att @ wh
    hh = jnp.where(hh > 0, hh, jnp.exp(hh) - 1.0)
    y = jnp.transpose(hh, (0, 2, 1))[..., None]
    w4 = jnp.transpose(p["conv_w_k"], (1, 2, 0))[..., None]          # (F, F, K, 1)
    out = jax.lax.conv_general_dilated(
        y, w4, window_strides=(1, 1), padding=((PAD, PAD), (0, 0)),
        dimension_numbers=("NCHW", "OIHW", "NCHW"))
    out = out + p["conv_b"].reshape(1, -1, 1, 1)
    scale = p["bn_g"] / jnp.sqrt(p["bn_v"] + BN_EPS)
    bias = p["bn_b"] - p["bn_m"] * scale
    out = out * scale.reshape(1, -1, 1, 1) + bias.reshape(1, -1, 1, 1)
    return jnp.maximum(out, 0.0)


# ------------------------------- parameter init --------------------------------
def init_params(key):
    ks = jax.random.split(key, 12)
    gain = 1.414

    def xavier(k, shape):                       # torch xavier_uniform_ on (out, in)
        fan_out, fan_in = shape
        lim = gain * float(np.sqrt(6.0 / (fan_in + fan_out)))
        return jax.random.uniform(k, shape, jnp.float32, -lim, lim)

    w = xavier(ks[0], (F_OUT, V))                                    # Wlinear.weight
    p = {
        "w_t": w.T,                                                  # (V, F)
        "w_b": jax.random.uniform(ks[1], (F_OUT,), jnp.float32, -0.1, 0.1),
        "ai_w": xavier(ks[2], (1, F_OUT)),
        "ai_b": jax.random.uniform(ks[3], (), jnp.float32, -0.1, 0.1),
        "aj_w": xavier(ks[4], (1, F_OUT)),
        "aj_b": jax.random.uniform(ks[5], (), jnp.float32, -0.1, 0.1),
        # unit_tcn Conv2d weight (F, F, 9, 1) stored as (K, F, F): wk[k] = W[:, :, k, 0]
        "conv_w_k": jnp.transpose(
            0.05 * jax.random.normal(ks[6], (F_OUT, F_OUT, K), jnp.float32),
            (2, 0, 1)),
        "conv_b": jax.random.uniform(ks[7], (F_OUT,), jnp.float32, -0.1, 0.1),
        "bn_g": 1.0 + 0.1 * jax.random.normal(ks[8], (F_OUT,), jnp.float32),
        "bn_b": 0.1 * jax.random.normal(ks[9], (F_OUT,), jnp.float32),
        "bn_m": 0.05 * jax.random.normal(ks[10], (F_OUT,), jnp.float32),
        "bn_v": jax.random.uniform(ks[11], (F_OUT,), jnp.float32, 0.5, 1.5),
    }
    return p


if __name__ == "__main__":
    key = jax.random.PRNGKey(0)
    kx, kadj, kp = jax.random.split(key, 3)

    x = jax.random.normal(kx, (N, C, T, V), jnp.float32)             # NCHW input
    adj = (jax.random.uniform(kadj, (NN, NN)) > 0.4).astype(jnp.float32)
    params = init_params(kp)

    out = jax.block_until_ready(stgat_block_forward(x, adj, params))
    ref = jax.block_until_ready(reference_forward(x, adj, params))

    assert out.shape == (N, F_OUT, NN, 1), out.shape
    np.testing.assert_allclose(np.asarray(out), np.asarray(ref),
                               rtol=2e-2, atol=2e-2)
    print("KERNEL_OK")
</pallas_src>

<mosaic_0001>
module attributes {stable_mosaic.version = 11 : i64} {
  func.func @_stgat_kernel(%arg0: i32, %arg1: memref<1x32x16xf32, #tpu.memory_space<vmem>>, %arg2: memref<32x32xf32, #tpu.memory_space<vmem>>, %arg3: memref<16x34xf32, #tpu.memory_space<vmem>>, %arg4: memref<1x34xf32, #tpu.memory_space<vmem>>, %arg5: memref<9x32x32xf32, #tpu.memory_space<vmem>>, %arg6: memref<32x1xf32, #tpu.memory_space<vmem>>, %arg7: memref<1x32x32xf32, #tpu.memory_space<vmem>>, %arg8: memref<32x40xf32, #tpu.memory_space<vmem>>) attributes {dimension_semantics = [#tpu.dimension_semantics<parallel>], iteration_bounds = array<i64: 2>, scalar_prefetch = 0 : i64, scratch_operands = 1 : i64, tpu.core_type = #tpu.core_type<tc>, window_params = [{transform_indices = @transform_0, window_bounds = array<i64: 1, 32, 16>}, {pipeline_mode = #tpu.pipeline_mode<synchronous>, transform_indices = @transform_1, window_bounds = array<i64: 32, 32>}, {pipeline_mode = #tpu.pipeline_mode<synchronous>, transform_indices = @transform_2, window_bounds = array<i64: 16, 34>}, {pipeline_mode = #tpu.pipeline_mode<synchronous>, transform_indices = @transform_3, window_bounds = array<i64: 1, 34>}, {pipeline_mode = #tpu.pipeline_mode<synchronous>, transform_indices = @transform_4, window_bounds = array<i64: 9, 32, 32>}, {pipeline_mode = #tpu.pipeline_mode<synchronous>, transform_indices = @transform_5, window_bounds = array<i64: 32, 1>}, {transform_indices = @transform_6, window_bounds = array<i64: 1, 32, 32>}]} {
    %c0 = arith.constant 0 : index
    %c0_0 = arith.constant 0 : index
    %c0_1 = arith.constant 0 : index
    %0 = vector.load %arg1[%c0, %c0_0, %c0_1] : memref<1x32x16xf32, #tpu.memory_space<vmem>>, vector<1x32x16xf32>
    %1 = vector.shape_cast %0 : vector<1x32x16xf32> to vector<32x16xf32>
    %c0_2 = arith.constant 0 : index
    %c0_3 = arith.constant 0 : index
    %2 = vector.load %arg3[%c0_2, %c0_3] : memref<16x34xf32, #tpu.memory_space<vmem>>, vector<16x34xf32>
    %cst = arith.constant dense<0.000000e+00> : vector<32x34xf32>
    %3 = tpu.matmul %1, %2, %cst {dimension_numbers = #tpu.dot_dimension_numbers<[1], [0], [0], [1], [0, 0, 1, 1], [], []>} : vector<32x16xf32>, vector<16x34xf32>, vector<32x34xf32> -> vector<32x34xf32>
    %c0_4 = arith.constant 0 : index
    %c0_5 = arith.constant 0 : index
    %4 = vector.load %arg4[%c0_4, %c0_5] : memref<1x34xf32, #tpu.memory_space<vmem>>, vector<1x34xf32>
    %5 = vector.broadcast %4 : vector<1x34xf32> to vector<32x34xf32>
    %6 = arith.addf %3, %5 : vector<32x34xf32>
    %7 = vector.extract_strided_slice %6 {offsets = [0, 0], sizes = [32, 32], strides = [1, 1]} : vector<32x34xf32> to vector<32x32xf32>
    %8 = vector.extract_strided_slice %6 {offsets = [0, 32], sizes = [32, 1], strides = [1, 1]} : vector<32x34xf32> to vector<32x1xf32>
    %9 = vector.extract_strided_slice %6 {offsets = [0, 33], sizes = [32, 1], strides = [1, 1]} : vector<32x34xf32> to vector<32x1xf32>
    %10 = tpu.transpose %9, [1, 0] : vector<32x1xf32> -> vector<1x32xf32>
    %11 = vector.broadcast %8 : vector<32x1xf32> to vector<32x32xf32>
    %12 = vector.broadcast %10 : vector<1x32xf32> to vector<32x32xf32>
    %13 = arith.addf %11, %12 : vector<32x32xf32>
    %cst_6 = arith.constant 0.000000e+00 : f32
    %14 = vector.broadcast %cst_6 : f32 to vector<32x32xf32>
    %15 = arith.cmpf ogt, %13, %14 : vector<32x32xf32>
    %cst_7 = arith.constant 0.00999999977 : f32
    %16 = vector.broadcast %cst_7 : f32 to vector<32x32xf32>
    %17 = arith.mulf %16, %13 : vector<32x32xf32>
    %18 = arith.select %15, %13, %17 : vector<32x32xi1>, vector<32x32xf32>
    %c0_8 = arith.constant 0 : index
    %c0_9 = arith.constant 0 : index
    %19 = vector.load %arg2[%c0_8, %c0_9] : memref<32x32xf32, #tpu.memory_space<vmem>>, vector<32x32xf32>
    %cst_10 = arith.constant 0.000000e+00 : f32
    %20 = vector.broadcast %cst_10 : f32 to vector<32x32xf32>
    %21 = arith.cmpf ogt, %19, %20 : vector<32x32xf32>
    %cst_11 = arith.constant -1.000000e+09 : f32
    %22 = vector.broadcast %cst_11 : f32 to vector<32x32xf32>
    %23 = arith.select %21, %18, %22 : vector<32x32xi1>, vector<32x32xf32>
    %cst_12 = arith.constant dense<0xFF800000> : vector<32xf32>
    %24 = vector.multi_reduction <maximumf>, %23, %cst_12 [1] : vector<32x32xf32> to vector<32xf32>
    %25 = vector.shape_cast %24 : vector<32xf32> to vector<32x1xf32>
    %26 = vector.broadcast %25 : vector<32x1xf32> to vector<32x32xf32>
    %27 = arith.subf %23, %26 : vector<32x32xf32>
    %28 = math.exp %27 : vector<32x32xf32>
    %cst_13 = arith.constant dense<0.000000e+00> : vector<32xf32>
    %29 = vector.multi_reduction <add>, %28, %cst_13 [1] : vector<32x32xf32> to vector<32xf32>
    %30 = vector.shape_cast %29 : vector<32xf32> to vector<32x1xf32>
    %31 = tpu.reciprocal %30 {approx = true} : vector<32x1xf32> -> vector<32x1xf32>
    %32 = vector.broadcast %31 : vector<32x1xf32> to vector<32x32xf32>
    %33 = arith.mulf %28, %32 : vector<32x32xf32>
    %cst_14 = arith.constant dense<0.000000e+00> : vector<32x32xf32>
    %34 = tpu.matmul %33, %7, %cst_14 {dimension_numbers = #tpu.dot_dimension_numbers<[1], [0], [0], [1], [0, 0, 1, 1], [], []>} : vector<32x32xf32>, vector<32x32xf32>, vector<32x32xf32> -> vector<32x32xf32>
    %cst_15 = arith.constant 0.000000e+00 : f32
    %35 = vector.broadcast %cst_15 : f32 to vector<32x32xf32>
    %36 = arith.cmpf ogt, %34, %35 : vector<32x32xf32>
    %cst_16 = arith.constant 0.000000e+00 : f32
    %37 = vector.broadcast %cst_16 : f32 to vector<32x32xf32>
    %38 = arith.minimumf %34, %37 : vector<32x32xf32>
    %39 = math.exp %38 : vector<32x32xf32>
    %cst_17 = arith.constant 1.000000e+00 : f32
    %40 = vector.broadcast %cst_17 : f32 to vector<32x32xf32>
    %41 = arith.subf %39, %40 : vector<32x32xf32>
    %42 = arith.select %36, %34, %41 : vector<32x32xi1>, vector<32x32xf32>
    %cst_18 = arith.constant 0.000000e+00 : f32
    %43 = vector.broadcast %cst_18 : f32 to vector<32x4xf32>
    %c0_19 = arith.constant 0 : index
    %c0_20 = arith.constant 0 : index
    %44 = vector.load %arg8[%c0_19, %c0_20] : memref<32x40xf32, #tpu.memory_space<vmem>>, vector<32x4xf32>
    tpu.vector_store %arg8[%c0_19, %c0_20], %43 {strides = array<i32>} : memref<32x40xf32, #tpu.memory_space<vmem>>, vector<32x4xf32>,
    %cst_21 = arith.constant 0.000000e+00 : f32
    %45 = vector.broadcast %cst_21 : f32 to vector<32x4xf32>
    %c0_22 = arith.constant 0 : index
    %c36 = arith.constant 36 : index
    %46 = vector.load %arg8[%c0_22, %c36] : memref<32x40xf32, #tpu.memory_space<vmem>>, vector<32x4xf32>
    tpu.vector_store %arg8[%c0_22, %c36], %45 {strides = array<i32>} : memref<32x40xf32, #tpu.memory_space<vmem>>, vector<32x4xf32>,
    %47 = tpu.transpose %42, [1, 0] : vector<32x32xf32> -> vector<32x32xf32>
    %c0_23 = arith.constant 0 : index
    %c4 = arith.constant 4 : index
    %48 = vector.load %arg8[%c0_23, %c4] : memref<32x40xf32, #tpu.memory_space<vmem>>, vector<32x32xf32>
    tpu.vector_store %arg8[%c0_23, %c4], %47 {strides = array<i32>} : memref<32x40xf32, #tpu.memory_space<vmem>>, vector<32x32xf32>,
    %c0_24 = arith.constant 0 : index
    %c0_25 = arith.constant 0 : index
    %49 = vector.load %arg6[%c0_24, %c0_25] : memref<32x1xf32, #tpu.memory_space<vmem>>, vector<32x1xf32>
    %c0_26 = arith.constant 0 : index
    %c0_27 = arith.constant 0 : index
    %c0_28 = arith.constant 0 : index
    %50 = vector.load %arg5[%c0_26, %c0_27, %c0_28] : memref<9x32x32xf32, #tpu.memory_space<vmem>>, vector<1x32x32xf32>
    %51 = vector.shape_cast %50 : vector<1x32x32xf32> to vector<32x32xf32>
    %c0_29 = arith.constant 0 : index
    %c0_30 = arith.constant 0 : index
    %52 = vector.load %arg8[%c0_29, %c0_30] : memref<32x40xf32, #tpu.memory_space<vmem>>, vector<32x32xf32>
    %cst_31 = arith.constant dense<0.000000e+00> : vector<32x32xf32>
    %53 = tpu.matmul %51, %52, %cst_31 {dimension_numbers = #tpu.dot_dimension_numbers<[1], [0], [0], [1], [0, 0, 1, 1], [], []>} : vector<32x32xf32>, vector<32x32xf32>, vector<32x32xf32> -> vector<32x32xf32>
    %54 = vector.broadcast %49 : vector<32x1xf32> to vector<32x32xf32>
    %55 = arith.addf %54, %53 : vector<32x32xf32>
    %c1 = arith.constant 1 : index
    %c0_32 = arith.constant 0 : index
    %c0_33 = arith.constant 0 : index
    %56 = vector.load %arg5[%c1, %c0_32, %c0_33] : memref<9x32x32xf32, #tpu.memory_space<vmem>>, vector<1x32x32xf32>
    %57 = vector.shape_cast %56 : vector<1x32x32xf32> to vector<32x32xf32>
    %c0_34 = arith.constant 0 : index
    %c1_35 = arith.constant 1 : index
    %58 = vector.load %arg8[%c0_34, %c1_35] : memref<32x40xf32, #tpu.memory_space<vmem>>, vector<32x32xf32>
    %cst_36 = arith.constant dense<0.000000e+00> : vector<32x32xf32>
    %59 = tpu.matmul %57, %58, %cst_36 {dimension_numbers = #tpu.dot_dimension_numbers<[1], [0], [0], [1], [0, 0, 1, 1], [], []>} : vector<32x32xf32>, vector<32x32xf32>, vector<32x32xf32> -> vector<32x32xf32>
    %60 = arith.addf %55, %59 : vector<32x32xf32>
    %c2 = arith.constant 2 : index
    %c0_37 = arith.constant 0 : index
    %c0_38 = arith.constant 0 : index
    %61 = vector.load %arg5[%c2, %c0_37, %c0_38] : memref<9x32x32xf32, #tpu.memory_space<vmem>>, vector<1x32x32xf32>
    %62 = vector.shape_cast %61 : vector<1x32x32xf32> to vector<32x32xf32>
    %c0_39 = arith.constant 0 : index
    %c2_40 = arith.constant 2 : index
    %63 = vector.load %arg8[%c0_39, %c2_40] : memref<32x40xf32, #tpu.memory_space<vmem>>, vector<32x32xf32>
    %cst_41 = arith.constant dense<0.000000e+00> : vector<32x32xf32>
    %64 = tpu.matmul %62, %63, %cst_41 {dimension_numbers = #tpu.dot_dimension_numbers<[1], [0], [0], [1], [0, 0, 1, 1], [], []>} : vector<32x32xf32>, vector<32x32xf32>, vector<32x32xf32> -> vector<32x32xf32>
    %65 = arith.addf %60, %64 : vector<32x32xf32>
    %c3 = arith.constant 3 : index
    %c0_42 = arith.constant 0 : index
    %c0_43 = arith.constant 0 : index
    %66 = vector.load %arg5[%c3, %c0_42, %c0_43] : memref<9x32x32xf32, #tpu.memory_space<vmem>>, vector<1x32x32xf32>
    %67 = vector.shape_cast %66 : vector<1x32x32xf32> to vector<32x32xf32>
    %c0_44 = arith.constant 0 : index
    %c3_45 = arith.constant 3 : index
    %68 = vector.load %arg8[%c0_44, %c3_45] : memref<32x40xf32, #tpu.memory_space<vmem>>, vector<32x32xf32>
    %cst_46 = arith.constant dense<0.000000e+00> : vector<32x32xf32>
    %69 = tpu.matmul %67, %68, %cst_46 {dimension_numbers = #tpu.dot_dimension_numbers<[1], [0], [0], [1], [0, 0, 1, 1], [], []>} : vector<32x32xf32>, vector<32x32xf32>, vector<32x32xf32> -> vector<32x32xf32>
    %70 = arith.addf %65, %69 : vector<32x32xf32>
    %c4_47 = arith.constant 4 : index
    %c0_48 = arith.constant 0 : index
    %c0_49 = arith.constant 0 : index
    %71 = vector.load %arg5[%c4_47, %c0_48, %c0_49] : memref<9x32x32xf32, #tpu.memory_space<vmem>>, vector<1x32x32xf32>
    %72 = vector.shape_cast %71 : vector<1x32x32xf32> to vector<32x32xf32>
    %c0_50 = arith.constant 0 : index
    %c4_51 = arith.constant 4 : index
    %73 = vector.load %arg8[%c0_50, %c4_51] : memref<32x40xf32, #tpu.memory_space<vmem>>, vector<32x32xf32>
    %cst_52 = arith.constant dense<0.000000e+00> : vector<32x32xf32>
    %74 = tpu.matmul %72, %73, %cst_52 {dimension_numbers = #tpu.dot_dimension_numbers<[1], [0], [0], [1], [0, 0, 1, 1], [], []>} : vector<32x32xf32>, vector<32x32xf32>, vector<32x32xf32> -> vector<32x32xf32>
    %75 = arith.addf %70, %74 : vector<32x32xf32>
    %c5 = arith.constant 5 : index
    %c0_53 = arith.constant 0 : index
    %c0_54 = arith.constant 0 : index
    %76 = vector.load %arg5[%c5, %c0_53, %c0_54] : memref<9x32x32xf32, #tpu.memory_space<vmem>>, vector<1x32x32xf32>
    %77 = vector.shape_cast %76 : vector<1x32x32xf32> to vector<32x32xf32>
    %c0_55 = arith.constant 0 : index
    %c5_56 = arith.constant 5 : index
    %78 = vector.load %arg8[%c0_55, %c5_56] : memref<32x40xf32, #tpu.memory_space<vmem>>, vector<32x32xf32>
    %cst_57 = arith.constant dense<0.000000e+00> : vector<32x32xf32>
    %79 = tpu.matmul %77, %78, %cst_57 {dimension_numbers = #tpu.dot_dimension_numbers<[1], [0], [0], [1], [0, 0, 1, 1], [], []>} : vector<32x32xf32>, vector<32x32xf32>, vector<32x32xf32> -> vector<32x32xf32>
    %80 = arith.addf %75, %79 : vector<32x32xf32>
    %c6 = arith.constant 6 : index
    %c0_58 = arith.constant 0 : index
    %c0_59 = arith.constant 0 : index
    %81 = vector.load %arg5[%c6, %c0_58, %c0_59] : memref<9x32x32xf32, #tpu.memory_space<vmem>>, vector<1x32x32xf32>
    %82 = vector.shape_cast %81 : vector<1x32x32xf32> to vector<32x32xf32>
    %c0_60 = arith.constant 0 : index
    %c6_61 = arith.constant 6 : index
    %83 = vector.load %arg8[%c0_60, %c6_61] : memref<32x40xf32, #tpu.memory_space<vmem>>, vector<32x32xf32>
    %cst_62 = arith.constant dense<0.000000e+00> : vector<32x32xf32>
    %84 = tpu.matmul %82, %83, %cst_62 {dimension_numbers = #tpu.dot_dimension_numbers<[1], [0], [0], [1], [0, 0, 1, 1], [], []>} : vector<32x32xf32>, vector<32x32xf32>, vector<32x32xf32> -> vector<32x32xf32>
    %85 = arith.addf %80, %84 : vector<32x32xf32>
    %c7 = arith.constant 7 : index
    %c0_63 = arith.constant 0 : index
    %c0_64 = arith.constant 0 : index
    %86 = vector.load %arg5[%c7, %c0_63, %c0_64] : memref<9x32x32xf32, #tpu.memory_space<vmem>>, vector<1x32x32xf32>
    %87 = vector.shape_cast %86 : vector<1x32x32xf32> to vector<32x32xf32>
    %c0_65 = arith.constant 0 : index
    %c7_66 = arith.constant 7 : index
    %88 = vector.load %arg8[%c0_65, %c7_66] : memref<32x40xf32, #tpu.memory_space<vmem>>, vector<32x32xf32>
    %cst_67 = arith.constant dense<0.000000e+00> : vector<32x32xf32>
    %89 = tpu.matmul %87, %88, %cst_67 {dimension_numbers = #tpu.dot_dimension_numbers<[1], [0], [0], [1], [0, 0, 1, 1], [], []>} : vector<32x32xf32>, vector<32x32xf32>, vector<32x32xf32> -> vector<32x32xf32>
    %90 = arith.addf %85, %89 : vector<32x32xf32>
    %c8 = arith.constant 8 : index
    %c0_68 = arith.constant 0 : index
    %c0_69 = arith.constant 0 : index
    %91 = vector.load %arg5[%c8, %c0_68, %c0_69] : memref<9x32x32xf32, #tpu.memory_space<vmem>>, vector<1x32x32xf32>
    %92 = vector.shape_cast %91 : vector<1x32x32xf32> to vector<32x32xf32>
    %c0_70 = arith.constant 0 : index
    %c8_71 = arith.constant 8 : index
    %93 = vector.load %arg8[%c0_70, %c8_71] : memref<32x40xf32, #tpu.memory_space<vmem>>, vector<32x32xf32>
    %cst_72 = arith.constant dense<0.000000e+00> : vector<32x32xf32>
    %94 = tpu.matmul %92, %93, %cst_72 {dimension_numbers = #tpu.dot_dimension_numbers<[1], [0], [0], [1], [0, 0, 1, 1], [], []>} : vector<32x32xf32>, vector<32x32xf32>, vector<32x32xf32> -> vector<32x32xf32>
    %95 = arith.addf %90, %94 : vector<32x32xf32>
    %cst_73 = arith.constant 0.000000e+00 : f32
    %96 = vector.broadcast %cst_73 : f32 to vector<32x32xf32>
    %97 = arith.maximumf %95, %96 : vector<32x32xf32>
    %c0_74 = arith.constant 0 : index
    %c0_75 = arith.constant 0 : index
    %c0_76 = arith.constant 0 : index
    %98 = vector.load %arg7[%c0_74, %c0_75, %c0_76] : memref<1x32x32xf32, #tpu.memory_space<vmem>>, vector<1x32x32xf32>
    %99 = vector.shape_cast %98 : vector<1x32x32xf32> to vector<32x32xf32>
    %100 = vector.shape_cast %97 : vector<32x32xf32> to vector<1x32x32xf32>
    tpu.vector_store %arg7[%c0_74, %c0_75, %c0_76], %100 {strides = array<i32>} : memref<1x32x32xf32, #tpu.memory_space<vmem>>, vector<1x32x32xf32>,
    return
  }
  func.func @transform_0(%arg0: i32) -> (i32, i32, i32) {
    %c0_i32 = arith.constant 0 : i32
    %c0_i32_0 = arith.constant 0 : i32
    %c0_i32_1 = arith.constant 0 : i32
    return %arg0, %c0_i32, %c0_i32_0 : i32, i32, i32
  }
  func.func @transform_1(%arg0: i32) -> (i32, i32) {
    %c0_i32 = arith.constant 0 : i32
    %c0_i32_0 = arith.constant 0 : i32
    %c0_i32_1 = arith.constant 0 : i32
    return %c0_i32, %c0_i32_0 : i32, i32
  }
  func.func @transform_2(%arg0: i32) -> (i32, i32) {
    %c0_i32 = arith.constant 0 : i32
    %c0_i32_0 = arith.constant 0 : i32
    %c0_i32_1 = arith.constant 0 : i32
    return %c0_i32, %c0_i32_0 : i32, i32
  }
  func.func @transform_3(%arg0: i32) -> (i32, i32) {
    %c0_i32 = arith.constant 0 : i32
    %c0_i32_0 = arith.constant 0 : i32
    %c0_i32_1 = arith.constant 0 : i32
    return %c0_i32, %c0_i32_0 : i32, i32
  }
  func.func @transform_4(%arg0: i32) -> (i32, i32, i32) {
    %c0_i32 = arith.constant 0 : i32
    %c0_i32_0 = arith.constant 0 : i32
    %c0_i32_1 = arith.constant 0 : i32
    %c0_i32_2 = arith.constant 0 : i32
    return %c0_i32, %c0_i32_0, %c0_i32_1 : i32, i32, i32
  }
  func.func @transform_5(%arg0: i32) -> (i32, i32) {
    %c0_i32 = arith.constant 0 : i32
    %c0_i32_0 = arith.constant 0 : i32
    %c0_i32_1 = arith.constant 0 : i32
    return %c0_i32, %c0_i32_0 : i32, i32
  }
  func.func @transform_6(%arg0: i32) -> (i32, i32, i32) {
    %c0_i32 = arith.constant 0 : i32
    %c0_i32_0 = arith.constant 0 : i32
    %c0_i32_1 = arith.constant 0 : i32
    return %arg0, %c0_i32, %c0_i32_0 : i32, i32, i32
  }
}

</mosaic_0001>

<llo_original>
// kernel: tpu_custom_call.1
$region0: #{tpu_custom_call.1}
  #allocation0 [shape = 'u32[]', space=smem, size = 0x4, offset = 0x4, fixed_abs, tag = 'smem constant byte address 0x4 - core index']
  #allocation1 [shape = 'u32[144,128]{1,0:T(1,128)}', space=vmem, size = 0x12000, scoped, tag = 'internal scratch']
  #allocation2 [shape = 'f32[32,40]{1,0:T(8,128)}', space=vmem, size = 0x4000, scoped, tag = 'scratch operand']
  %s0 = inlined_call_operand.vmem [shape: f32[2,32,16], index: 0, kind: input, shape index: {}]
  %s1 = inlined_call_operand.vmem [shape: f32[32,32], index: 1, kind: input, shape index: {}]
  %s2 = inlined_call_operand.vmem [shape: f32[16,34], index: 2, kind: input, shape index: {}]
  %s3 = inlined_call_operand.vmem [shape: f32[1,34], index: 3, kind: input, shape index: {}]
  %s4 = inlined_call_operand.hbm [shape: f32[9,32,32], index: 4, kind: input, shape index: {}]
  %s5 = inlined_call_operand.vmem [shape: f32[32,1], index: 5, kind: input, shape index: {}]
  %s6 = inlined_call_operand.hbm [shape: f32[2,32,32], index: 6, kind: output, shape index: {}]
  %s7 = sld [smem:[#allocation0]]
  $region61: #{tpu_custom_call.1} parent=0
    _
  %s9 = ssub.s32 1, %s7
  %s10 = scalar_select 0, %s9, %s7
  $region1: #{tpu_custom_call.1} parent=0
    #allocation3 [shape = 'u8[147456]{0}', space=vmem, size = 0x24000, scoped, tag = 'input window, operand 4, single buffered']
    #allocation4 [shape = 's32[2]{0}', space=sflag, size = 0x8, scoped, tag = 'scoped memory for tpu_custom_call.1']
    #allocation5 [shape = 's32[2]{0}', space=sflag, size = 0x8, scoped, tag = 'scoped memory for tpu_custom_call.1']
    #allocation6 [shape = 'u8[32768]{0}', space=vmem, size = 0x8000, scoped, tag = 'output window, operand 0']
    %11 = vsyncpa [#allocation4], 0
    %12 = vsyncpa [#allocation5], 0
    %s13 = scalar_lea.sflag [#allocation5], 1
    %14 = vsyncpa %s13, 0
    loop: start=0, step=1, limit=4
    $region2: #{tpu_custom_call.1} parent=1 // loop_pre_header
      _
    $region3: #{tpu_custom_call.1} parent=1 // loop_header
      %s16 = sphi 0, %s20
      %p17 = scmp.ge.s32.totalorder %s16, 4
      %s26 = sphi 0, %s28
      %s29 = sphi 0, %s26
      %s30 = sphi 0, %s29
      %s46 = sphi 0, %s30
      %s50 = sphi 0, %s50
      %s52 = sphi 0, %s50
      %s53 = sphi 0, %s52
      %s67 = sphi 0, %s53
      %s71 = sphi 0, %s71
      %s73 = sphi 0, %s71
      %s74 = sphi 0, %s73
      %s88 = sphi 0, %s74
      %s92 = sphi 0, %s92
      %s94 = sphi 0, %s92
      %s95 = sphi 0, %s94
      %s109 = sphi 0, %s95
      %s113 = sphi 0, %s113
      %s115 = sphi 0, %s113
      %s116 = sphi 0, %s115
      %s130 = sphi 0, %s116
      %s134 = sphi 0, %s134
      %s136 = sphi 0, %s134
      %s137 = sphi 0, %s136
      %s151 = sphi 0, %s137
      %s157 = sphi 0, %s159
      %s160 = sphi 0, %s157
      %s161 = sphi 0, %s160
      %s177 = sphi 0, %s161
    $region4: #{tpu_custom_call.1} parent=1 // loop_header_branch
      %19 = sbr.rel (%p17) target = $region8
    $region5: #{tpu_custom_call.1} parent=1 // loop_body
      %s21 = ssub.s32 %s16, 1
      %s22 = ssub.s32 %s16, 2
      %s23 = sadd.s32 %s16, 1
      %s24 = ssub.s32 %s16, %s23
      %p25 = scmp.eq.s32.totalorder %s24, 0
      %s27 = sadd.s32 %s26, 1
      %s28 = scalar_select %p25, %s26, %s27
      %p31 = pneg %p25
      %p32 = scmp.eq.s32.totalorder %s16, 1
      %p33 = por %p31, %p32
      %p34 = scmp.ne.s32.totalorder %s26, %s29
      %p35 = scmp.eq.s32.totalorder %s16, 0
      %p36 = por %p34, %p35
      %p37 = scmp.ne.s32.totalorder %s26, %s29
      %p38 = scmp.eq.s32.totalorder %s21, 1
      %p39 = por %p37, %p38
      %p40 = scmp.ne.s32.totalorder %s29, %s30
      %p41 = scmp.eq.s32.totalorder %s21, 0
      %p42 = por %p40, %p41
      %p43 = scmp.ne.s32.totalorder %s29, %s30
      %p44 = scmp.eq.s32.totalorder %s22, 1
      %p45 = por %p43, %p44
      %p47 = scmp.ne.s32.totalorder %s30, %s46
      %p48 = scmp.eq.s32.totalorder %s22, 0
      %p49 = por %p47, %p48
      %s51 = sadd.s32 %s50, 1
      %p54 = scmp.eq.s32.totalorder %s16, 1
      %p55 = scmp.ne.s32.totalorder %s50, %s52
      %p56 = scmp.eq.s32.totalorder %s16, 0
      %p57 = por %p55, %p56
      %p58 = scmp.ne.s32.totalorder %s50, %s52
      %p59 = scmp.eq.s32.totalorder %s21, 1
      %p60 = por %p58, %p59
      %p61 = scmp.ne.s32.totalorder %s52, %s53
      %p62 = scmp.eq.s32.totalorder %s21, 0
      %p63 = por %p61, %p62
      %p64 = scmp.ne.s32.totalorder %s52, %s53
      %p65 = scmp.eq.s32.totalorder %s22, 1
      %p66 = por %p64, %p65
      %p68 = scmp.ne.s32.totalorder %s53, %s67
      %p69 = scmp.eq.s32.totalorder %s22, 0
      %p70 = por %p68, %p69
      %s72 = sadd.s32 %s71, 1
      %p75 = scmp.eq.s32.totalorder %s16, 1
      %p76 = scmp.ne.s32.totalorder %s71, %s73
      %p77 = scmp.eq.s32.totalorder %s16, 0
      %p78 = por %p76, %p77
      %p79 = scmp.ne.s32.totalorder %s71, %s73
      %p80 = scmp.eq.s32.totalorder %s21, 1
      %p81 = por %p79, %p80
      %p82 = scmp.ne.s32.totalorder %s73, %s74
      %p83 = scmp.eq.s32.totalorder %s21, 0
      %p84 = por %p82, %p83
      %p85 = scmp.ne.s32.totalorder %s73, %s74
      %p86 = scmp.eq.s32.totalorder %s22, 1
      %p87 = por %p85, %p86
      %p89 = scmp.ne.s32.totalorder %s74, %s88
      %p90 = scmp.eq.s32.totalorder %s22, 0
      %p91 = por %p89, %p90
      %s93 = sadd.s32 %s92, 1
      %p96 = scmp.eq.s32.totalorder %s16, 1
      %p97 = scmp.ne.s32.totalorder %s92, %s94
      %p98 = scmp.eq.s32.totalorder %s16, 0
      %p99 = por %p97, %p98
      %p100 = scmp.ne.s32.totalorder %s92, %s94
      %p101 = scmp.eq.s32.totalorder %s21, 1
      %p102 = por %p100, %p101
      %p103 = scmp.ne.s32.totalorder %s94, %s95
      %p104 = scmp.eq.s32.totalorder %s21, 0
      %p105 = por %p103, %p104
      %p106 = scmp.ne.s32.totalorder %s94, %s95
      %p107 = scmp.eq.s32.totalorder %s22, 1
      %p108 = por %p106, %p107
      %p110 = scmp.ne.s32.totalorder %s95, %s109
      %p111 = scmp.eq.s32.totalorder %s22, 0
      %p112 = por %p110, %p111
      %s114 = sadd.s32 %s113, 1
      %p117 = scmp.eq.s32.totalorder %s16, 1
      %p118 = scmp.ne.s32.totalorder %s113, %s115
      %p119 = scmp.eq.s32.totalorder %s16, 0
      %p120 = por %p118, %p119
      %p121 = scmp.ne.s32.totalorder %s113, %s115
      %p122 = scmp.eq.s32.totalorder %s21, 1
      %p123 = por %p121, %p122
      %p124 = scmp.ne.s32.totalorder %s115, %s116
      %p125 = scmp.eq.s32.totalorder %s21, 0
      %p126 = por %p124, %p125
      %p127 = scmp.ne.s32.totalorder %s115, %s116
      %p128 = scmp.eq.s32.totalorder %s22, 1
      %p129 = por %p127, %p128
      %p131 = scmp.ne.s32.totalorder %s116, %s130
      %p132 = scmp.eq.s32.totalorder %s22, 0
      %p133 = por %p131, %p132
      %s135 = sadd.s32 %s134, 1
      %p138 = scmp.eq.s32.totalorder %s16, 1
      %p139 = scmp.ne.s32.totalorder %s134, %s136
      %p140 = scmp.eq.s32.totalorder %s16, 0
      %p141 = por %p139, %p140
      %p142 = scmp.ne.s32.totalorder %s134, %s136
      %p143 = scmp.eq.s32.totalorder %s21, 1
      %p144 = por %p142, %p143
      %p145 = scmp.ne.s32.totalorder %s136, %s137
      %p146 = scmp.eq.s32.totalorder %s21, 0
      %p147 = por %p145, %p146
      %p148 = scmp.ne.s32.totalorder %s136, %s137
      %p149 = scmp.eq.s32.totalorder %s22, 1
      %p150 = por %p148, %p149
      %p152 = scmp.ne.s32.totalorder %s137, %s151
      %p153 = scmp.eq.s32.totalorder %s22, 0
      %p154 = por %p152, %p153
      %s155 = ssub.s32 %s16, %s23
      %p156 = scmp.eq.s32.totalorder %s155, 0
      %s158 = sadd.s32 %s157, 1
      %s159 = scalar_select %p156, %s157, %s158
      %p162 = pneg %p156
      %p163 = scmp.eq.s32.totalorder %s16, 1
      %p164 = por %p162, %p163
      %p165 = scmp.ne.s32.totalorder %s157, %s160
      %p166 = scmp.eq.s32.totalorder %s16, 0
      %p167 = por %p165, %p166
      %p168 = scmp.ne.s32.totalorder %s157, %s160
      %p169 = scmp.eq.s32.totalorder %s21, 1
      %p170 = por %p168, %p169
      %p171 = scmp.ne.s32.totalorder %s160, %s161
      %p172 = scmp.eq.s32.totalorder %s21, 0
      %p173 = por %p171, %p172
      %p174 = scmp.ne.s32.totalorder %s160, %s161
      %p175 = scmp.eq.s32.totalorder %s22, 1
      %p176 = por %p174, %p175
      %p178 = scmp.ne.s32.totalorder %s161, %s177
      %p179 = scmp.eq.s32.totalorder %s22, 0
      %p180 = por %p178, %p179
      %p181 = scmp.le.s32.totalorder 1, %s16
      %p182 = scmp.lt.s32.totalorder %s16, 3
      %p183 = pnand %p181, %p182
      %p184 = pneg %p183
      // Predicated region
      $region9: #{tpu_custom_call.1} parent=5 // pred_check
        _
      $region10: #{tpu_custom_call.1} parent=5 // pred_check_branch
        %186 = sbr.rel (%p183) target = $region12
      $region11: #{tpu_custom_call.1} parent=5 // pred_region
        %s187 = ssub.s32 %s16, 1
        // Predicated region
        $region13: #{tpu_custom_call.1} parent=11 // pred_check
          %p188 = pneg %p63
        $region14: #{tpu_custom_call.1} parent=11 // pred_check_branch
          %190 = sbr.rel (%p188) target = $region16
        $region15: #{tpu_custom_call.1} parent=11 // pred_region
          _
        $region16: #{tpu_custom_call.1} parent=11 // pred_fallthru
          _
        // Predicated region
        $region17: #{tpu_custom_call.1} parent=11 // pred_check
          %p191 = pneg %p84
        $region18: #{tpu_custom_call.1} parent=11 // pred_check_branch
          %193 = sbr.rel (%p191) target = $region20
        $region19: #{tpu_custom_call.1} parent=11 // pred_region
          _
        $region20: #{tpu_custom_call.1} parent=11 // pred_fallthru
          _
        // Predicated region
        $region21: #{tpu_custom_call.1} parent=11 // pred_check
          %p194 = pneg %p105
        $region22: #{tpu_custom_call.1} parent=11 // pred_check_branch
          %196 = sbr.rel (%p194) target = $region24
        $region23: #{tpu_custom_call.1} parent=11 // pred_region
          _
        $region24: #{tpu_custom_call.1} parent=11 // pred_fallthru
          _
        // Predicated region
        $region25: #{tpu_custom_call.1} parent=11 // pred_check
          %p197 = pneg %p126
        $region26: #{tpu_custom_call.1} parent=11 // pred_check_branch
          %199 = sbr.rel (%p197) target = $region28
        $region27: #{tpu_custom_call.1} parent=11 // pred_region
          %s201 = ssub.s32 4608, 4608
          %202 = vsyncadd [#allocation4], %s201
          %s203 = sshll.u32 [#allocation3], 4
          %s204 = int_to_ptr.vmem [resolvable:$true] %s203
          %209 = dma.hbm_to_vmem [thread:$0]  %s4, 4608, %s204, [#allocation4], 128, 128, 8
        $region28: #{tpu_custom_call.1} parent=11 // pred_fallthru
          _
        // Predicated region
        $region29: #{tpu_custom_call.1} parent=11 // pred_check
          %p210 = pneg %p147
        $region30: #{tpu_custom_call.1} parent=11 // pred_check_branch
          %212 = sbr.rel (%p210) target = $region32
        $region31: #{tpu_custom_call.1} parent=11 // pred_region
          _
        $region32: #{tpu_custom_call.1} parent=11 // pred_fallthru
          _
      $region12: #{tpu_custom_call.1} parent=5 // pred_fallthru
        _
      %p213 = scmp.lt.s32.totalorder %s16, 2
      // Predicated region
      $region33: #{tpu_custom_call.1} parent=5 // pred_check
        %p214 = pneg %p213
      $region34: #{tpu_custom_call.1} parent=5 // pred_check_branch
        %216 = sbr.rel (%p214) target = $region36
      $region35: #{tpu_custom_call.1} parent=5 // pred_region
        // Predicated region
        $region37: #{tpu_custom_call.1} parent=35 // pred_check
          %p217 = pneg %p36
        $region38: #{tpu_custom_call.1} parent=35 // pred_check_branch
          %219 = sbr.rel (%p217) target = $region40
        $region39: #{tpu_custom_call.1} parent=35 // pred_region
          %p220 = scmp.lt.s32.totalorder %s16, 1
          %s221 = scalar_select %p220, %s16, 1
          %s222 = smul.addr %s221, 4
          %s223 = smul.addr %s222, 8
          %s224 = scalar_lea.vmem %s0, %s223
        $region40: #{tpu_custom_call.1} parent=35 // pred_fallthru
          _
      $region36: #{tpu_custom_call.1} parent=5 // pred_fallthru
        _
      %p225 = scmp.le.s32.totalorder 1, %s16
      %p226 = scmp.lt.s32.totalorder %s16, 3
      %p227 = pnand %p225, %p226
      %p228 = pneg %p227
      // Predicated region
      $region41: #{tpu_custom_call.1} parent=5 // pred_check
        _
      $region42: #{tpu_custom_call.1} parent=5 // pred_check_branch
        %230 = sbr.rel (%p227) target = $region44
      $region43: #{tpu_custom_call.1} parent=5 // pred_region
        %s231 = ssub.s32 %s16, 1
        // Predicated region
        $region45: #{tpu_custom_call.1} parent=43 // pred_check
          %p232 = pneg %p126
        $region46: #{tpu_custom_call.1} parent=43 // pred_check_branch
          %234 = sbr.rel (%p232) target = $region48
        $region47: #{tpu_custom_call.1} parent=43 // pred_region
          %235 = dma.done [#allocation4], 4608
        $region48: #{tpu_custom_call.1} parent=43 // pred_fallthru
          _
        %p236 = scmp.lt.s32.totalorder %s21, 1
        %s237 = scalar_select %p236, %s21, 1
        %s238 = smul.addr %s237, 4
        %s239 = smul.addr %s238, 8
        %s240 = scalar_lea.vmem %s0, %s239
        %p241 = pneg %p42
        %p242 = pneg %p39
        %p243 = pneg %p63
        %p244 = pneg %p60
        %p245 = pneg %p84
        %p246 = pneg %p81
        %p247 = pneg %p105
        %p248 = pneg %p102
        %p249 = pneg %p126
        %p250 = pneg %p123
        %p251 = pneg %p147
        %p252 = pneg %p144
        %p253 = pneg %p173
        %p254 = pneg %p170
        %s255 = sand.u32 %s160, 1
        %s256 = scalar_lea.sflag [#allocation5], %s255
        %s257 = sand.u32 %s160, 1
        %s258 = smul.addr %s257, 32
        %s259 = scalar_lea.vmem [#allocation6], %s258
        %p260 = scmp.lt.s32.totalorder %s21, 1
        %s261 = scalar_select %p260, %s21, 1
        %s262 = smul.addr %s261, 4
        %s263 = smul.addr %s262, 8
        %s264 = scalar_lea.vmem %s0, %s263
        %v265 = vld [vmem:[%s264] sm:$0xff]
        %v266 = vld [vmem:[%s264 + $0x8] sm:$0xff]
        %v267 = vld [vmem:[%s264 + $0x10] sm:$0xff]
        %v268 = vld [vmem:[%s264 + $0x18] sm:$0xff]
        %v269 = vld [vmem:[%s2] sm:$0xff]
        %v270 = vld [vmem:[%s2 + $0x8] sm:$0xff]
        %v271 = vld [vmem:[%s3] sm:$0x1]
        %v273 = vlaneseq
        %v274 = vshrl.u32 %v273, 7
        %v275 = vsub.s32 0, %v274
        %v276 = vrot.slane %v271, %v275
        %vm278 = vcmask 130048
        %v280 = vsel %vm278, %v265, 0
        %v283 = vsel %vm278, %v266, 0
        %v286 = vsel %vm278, %v267, 0
        %v289 = vsel %vm278, %v268, 0
        %291 = vmatprep.subr.mxu0 0.0
        %292 = vmatpush1.msra.mxu0 %v269
        %293 = vmatprep.subr.mxu0 0.0
        %294 = vmatpush1.msra.mxu0 %v270
        %295 = vmatprep.subr.mxu0 0.0
        %296 = vmatpush1.msra.mxu0 0.0
        %297 = vmatprep.subr.mxu0 0.0
        %298 = vmatpush1.msra.mxu0 0.0
        %299 = vmatprep.subr.mxu0 0.0
        %300 = vmatpush1.msra.mxu0 0.0
        %301 = vmatprep.subr.mxu0 0.0
        %302 = vmatpush1.msra.mxu0 0.0
        %303 = vmatprep.subr.mxu0 0.0
        %304 = vmatpush1.msra.mxu0 0.0
        %305 = vmatprep.subr.mxu0 0.0
        %306 = vmatpush1.msra.mxu0 0.0
        %307 = vmatprep.subr.mxu0 0.0
        %308 = vmatpush1.msra.mxu0 0.0
        %309 = vmatprep.subr.mxu0 0.0
        %310 = vmatpush1.msra.mxu0 0.0
        %311 = vmatprep.subr.mxu0 0.0
        %312 = vmatpush1.msra.mxu0 0.0
        %313 = vmatprep.subr.mxu0 0.0
        %314 = vmatpush1.msra.mxu0 0.0
        %315 = vmatprep.subr.mxu0 0.0
        %316 = vmatpush1.msra.mxu0 0.0
        %317 = vmatprep.subr.mxu0 0.0
        %318 = vmatpush1.msra.mxu0 0.0
        %319 = vmatprep.subr.mxu0 0.0
        %320 = vmatpush1.msra.mxu0 0.0
        %321 = vmatprep.subr.mxu0 0.0
        %322 = vmatpush1.msra.mxu0 0.0
        %323 = vmatprep.subr.mxu0 0.0
        %324 = vmatpush1.msra.mxu0 0.0
        %325 = vmatprep.subr.mxu0 0.0
        %326 = vmatpush1.msra.mxu0 0.0
        %327 = vmatprep.subr.mxu0 0.0
        %328 = vmatpush1.msra.mxu0 0.0
        %329 = vmatprep.subr.mxu0 0.0
        %330 = vmatpush1.msra.mxu0 0.0
        %331 = vmatprep.subr.mxu0 0.0
        %332 = vmatpush1.msra.mxu0 0.0
        %333 = vmatprep.subr.mxu0 0.0
        %334 = vmatpush1.msra.mxu0 0.0
        %335 = vmatprep.subr.mxu0 0.0
        %336 = vmatpush1.msra.mxu0 0.0
        %337 = vmatprep.subr.mxu0 0.0
        %338 = vmatpush1.msra.mxu0 0.0
        %339 = vmatprep.subr.mxu0 0.0
        %340 = vmatpush1.msra.mxu0 0.0
        %341 = vmatprep.subr.mxu0 0.0
        %342 = vmatpush1.msra.mxu0 0.0
        %343 = vmatprep.subr.mxu0 0.0
        %344 = vmatpush1.msra.mxu0 0.0
        %345 = vmatprep.subr.mxu0 0.0
        %346 = vmatpush1.msra.mxu0 0.0
        %347 = vmatprep.subr.mxu0 0.0
        %348 = vmatpush1.msra.mxu0 0.0
        %349 = vmatprep.subr.mxu0 0.0
        %350 = vmatpush1.msra.mxu0 0.0
        %351 = vmatprep.subr.mxu0 0.0
        %352 = vmatpush1.msra.mxu0 0.0
        %353 = vmatprep.subr.mxu0 0.0
        %354 = vmatpush1.msra.mxu0 0.0
        %355 = vmatprep.mubr.f32.mxu0 0.0
        %356 = vmatmul.mubr.f32.gmra.mrb[0].mxu0 %v280
        %v357 = vpop.f32.mrb[0].mxu0
        %v358 = vadd.f32 %v276, %v357
        %v359 = vpop.f32.mrb[0].mxu0
        %360 = vmatprep.mubr.f32.mxu0 0.0
        %361 = vmatmul.mubr.f32.gmra.mrb[0].mxu0 %v283
        %v362 = vpop.f32.mrb[0].mxu0
        %v363 = vadd.f32 %v276, %v362
        %v364 = vpop.f32.mrb[0].mxu0
        %365 = vmatprep.mubr.f32.mxu0 0.0
        %366 = vmatmul.mubr.f32.gmra.mrb[0].mxu0 %v286
        %v367 = vpop.f32.mrb[0].mxu0
        %v368 = vadd.f32 %v276, %v367
        %v369 = vpop.f32.mrb[0].mxu0
        %370 = vmatprep.mubr.f32.mxu0 0.0
        %371 = vmatmul.mubr.f32.gmra.mrb[0].mxu0 %v289
        %v372 = vpop.f32.mrb[0].mxu0
        %v373 = vadd.f32 %v276, %v372
        %v374 = vpop.f32.mrb[0].mxu0
        %375 = vdwg.mxu0
        %380 = vrot.lane.b32.xlu0 %v358, 95
        %v381 = vpop.permute.xlu0 %380
        %382 = vrot.lane.b32.xlu0 %v363, 95
        %v383 = vpop.permute.xlu0 %382
        %384 = vrot.lane.b32.xlu0 %v368, 95
        %v385 = vpop.permute.xlu0 %384
        %386 = vrot.lane.b32.xlu0 %v373, 95
        %v387 = vpop.permute.xlu0 %386
        %392 = vxpose.xlu0.b32.start [1/16] %v381, 128
        %393 = vxpose.xlu0.b32.cont [2/16] %v383, 128
        %394 = vxpose.xlu0.b32.cont [3/16] %v385, 128
        %395 = vxpose.xlu0.b32.cont [4/16] %v387, 128
        %396 = vxpose.xlu0.b32.cont [5/16] 0.0, 128
        %397 = vxpose.xlu0.b32.cont [6/16] 0.0, 128
        %398 = vxpose.xlu0.b32.cont [7/16] 0.0, 128
        %399 = vxpose.xlu0.b32.cont [8/16] 0.0, 128
        %400 = vxpose.xlu0.b32.cont [9/16] 0.0, 128
        %401 = vxpose.xlu0.b32.cont [10/16] 0.0, 128
        %402 = vxpose.xlu0.b32.cont [11/16] 0.0, 128
        %403 = vxpose.xlu0.b32.cont [12/16] 0.0, 128
        %404 = vxpose.xlu0.b32.cont [13/16] 0.0, 128
        %405 = vxpose.xlu0.b32.cont [14/16] 0.0, 128
        %406 = vxpose.xlu0.b32.cont [15/16] 0.0, 128
        %407 = vxpose.xlu0.b32.end [16/16] 0.0, 128
        %v408 = vpop.trf.xlu0
        %v409 = vpop.trf.xlu0
        %v410 = vpop.trf.xlu0
        %v411 = vpop.trf.xlu0
        %v412 = vpop.trf.xlu0
        %v413 = vpop.trf.xlu0
        %v414 = vpop.trf.xlu0
        %v415 = vpop.trf.xlu0
        %v416 = vpop.trf.xlu0
        %v417 = vpop.trf.xlu0
        %v418 = vpop.trf.xlu0
        %v419 = vpop.trf.xlu0
        %v420 = vpop.trf.xlu0
        %v421 = vpop.trf.xlu0
        %v422 = vpop.trf.xlu0
        %v423 = vpop.trf.xlu0
        %424 = vset.pattern.permute.xlu0 32
        %425 = vperm.xlu0 %424, %v358
        %v426 = vpop.permute.xlu0 %425
        %428 = vset.pattern.permute.xlu0 32
        %429 = vperm.xlu0 %428, %v363
        %v430 = vpop.permute.xlu0 %429
        %432 = vset.pattern.permute.xlu0 32
        %433 = vperm.xlu0 %432, %v368
        %v434 = vpop.permute.xlu0 %433
        %436 = vset.pattern.permute.xlu0 32
        %437 = vperm.xlu0 %436, %v373
        %v438 = vpop.permute.xlu0 %437
        %v440 = vlaneseq
        %v441 = vshrl.u32 %v440, 7
        %v442 = vsub.s32 0, %v441
        %v443 = vrot.slane %v408, %v442
        %v444 = vadd.f32 %v426, %v443
        %v445 = vadd.f32 %v430, %v443
        %v446 = vadd.f32 %v434, %v443
        %v447 = vadd.f32 %v438, %v443
        %vm448 = vcmp.gt.f32.partialorder %v444, 0.0
        %vm449 = vcmp.gt.f32.partialorder %v445, 0.0
        %vm450 = vcmp.gt.f32.partialorder %v446, 0.0
        %vm451 = vcmp.gt.f32.partialorder %v447, 0.0
        %v452 = vmul.f32 %v444, 0.01
        %v453 = vmul.f32 %v445, 0.01
        %v454 = vmul.f32 %v446, 0.01
        %v455 = vmul.f32 %v447, 0.01
        %v456 = vsel %vm448, %v444, %v452
        %v457 = vsel %vm449, %v445, %v453
        %v458 = vsel %vm450, %v446, %v454
        %v459 = vsel %vm451, %v447, %v455
        %v460 = vld [vmem:[%s1] sm:$0xff]
        %v461 = vld [vmem:[%s1 + $0x8] sm:$0xff]
        %v462 = vld [vmem:[%s1 + $0x10] sm:$0xff]
        %v463 = vld [vmem:[%s1 + $0x18] sm:$0xff]
        %vm464 = vcmp.gt.f32.partialorder %v460, 0.0
        %vm465 = vcmp.gt.f32.partialorder %v461, 0.0
        %vm466 = vcmp.gt.f32.partialorder %v462, 0.0
        %vm467 = vcmp.gt.f32.partialorder %v463, 0.0
        %v468 = vsel %vm464, %v456, -1e+09
        %v469 = vsel %vm465, %v457, -1e+09
        %v470 = vsel %vm466, %v458, -1e+09
        %v471 = vsel %vm467, %v459, -1e+09
        %vm472 = vcmask 261120
        %v473 = vsel %vm472, %v468, -inf
        %474 = vmax.xlane.f32.xlu0 %v473
        %v475 = vpop.xlane.xlu0 %474
        %v476 = vsel %vm472, %v469, -inf
        %477 = vmax.xlane.f32.xlu0 %v476
        %v478 = vpop.xlane.xlu0 %477
        %v479 = vsel %vm472, %v470, -inf
        %480 = vmax.xlane.f32.xlu0 %v479
        %v481 = vpop.xlane.xlu0 %480
        %v482 = vsel %vm472, %v471, -inf
        %483 = vmax.xlane.f32.xlu0 %v482
        %v484 = vpop.xlane.xlu0 %483
        %v485 = vsub.f32 %v468, %v475
        %v486 = vsub.f32 %v469, %v478
        %v487 = vsub.f32 %v470, %v481
        %v488 = vsub.f32 %v471, %v484
        %v489 = vmul.f32 %v485, 1.442695
        %v490 = vpow.pop %v489
        %v491 = vmul.f32 %v486, 1.442695
        %v492 = vpow.pop %v491
        %v493 = vmul.f32 %v487, 1.442695
        %v494 = vpow.pop %v493
        %v495 = vmul.f32 %v488, 1.442695
        %v496 = vpow.pop %v495
        %v497 = vsel %vm472, %v490, 0.0
        %498 = vadd.xlane.f32.xlu0 %v497
        %v499 = vpop.xlane.xlu0 %498
        %v500 = vsel %vm472, %v492, 0.0
        %501 = vadd.xlane.f32.xlu0 %v500
        %v502 = vpop.xlane.xlu0 %501
        %v503 = vsel %vm472, %v494, 0.0
        %504 = vadd.xlane.f32.xlu0 %v503
        %v505 = vpop.xlane.xlu0 %504
        %v506 = vsel %vm472, %v496, 0.0
        %507 = vadd.xlane.f32.xlu0 %v506
        %v508 = vpop.xlane.xlu0 %507
        %v509 = vrcp.pop %v499
        %v510 = vrcp.pop %v502
        %v511 = vrcp.pop %v505
        %v512 = vrcp.pop %v508
        %v513 = vmul.f32 %v490, %v509
        %v514 = vmul.f32 %v492, %v510
        %v515 = vmul.f32 %v494, %v511
        %v516 = vmul.f32 %v496, %v512
        %v518 = vsel %vm472, %v513, 0
        %v521 = vsel %vm472, %v514, 0
        %v524 = vsel %vm472, %v515, 0
        %v527 = vsel %vm472, %v516, 0
        %529 = vmatprep.subr.mxu0 0.0
        %530 = vmatpush1.msra.mxu0 %v358
        %531 = vmatprep.subr.mxu0 0.0
        %532 = vmatpush1.msra.mxu0 %v363
        %533 = vmatprep.subr.mxu0 0.0
        %534 = vmatpush1.msra.mxu0 %v368
        %535 = vmatprep.subr.mxu0 0.0
        %536 = vmatpush1.msra.mxu0 %v373
        %537 = vmatprep.subr.mxu0 0.0
        %538 = vmatpush1.msra.mxu0 0.0
        %539 = vmatprep.subr.mxu0 0.0
        %540 = vmatpush1.msra.mxu0 0.0
        %541 = vmatprep.subr.mxu0 0.0
        %542 = vmatpush1.msra.mxu0 0.0
        %543 = vmatprep.subr.mxu0 0.0
        %544 = vmatpush1.msra.mxu0 0.0
        %545 = vmatprep.subr.mxu0 0.0
        %546 = vmatpush1.msra.mxu0 0.0
        %547 = vmatprep.subr.mxu0 0.0
        %548 = vmatpush1.msra.mxu0 0.0
        %549 = vmatprep.subr.mxu0 0.0
        %550 = vmatpush1.msra.mxu0 0.0
        %551 = vmatprep.subr.mxu0 0.0
        %552 = vmatpush1.msra.mxu0 0.0
        %553 = vmatprep.subr.mxu0 0.0
        %554 = vmatpush1.msra.mxu0 0.0
        %555 = vmatprep.subr.mxu0 0.0
        %556 = vmatpush1.msra.mxu0 0.0
        %557 = vmatprep.subr.mxu0 0.0
        %558 = vmatpush1.msra.mxu0 0.0
        %559 = vmatprep.subr.mxu0 0.0
        %560 = vmatpush1.msra.mxu0 0.0
        %561 = vmatprep.subr.mxu0 0.0
        %562 = vmatpush1.msra.mxu0 0.0
        %563 = vmatprep.subr.mxu0 0.0
        %564 = vmatpush1.msra.mxu0 0.0
        %565 = vmatprep.subr.mxu0 0.0
        %566 = vmatpush1.msra.mxu0 0.0
        %567 = vmatprep.subr.mxu0 0.0
        %568 = vmatpush1.msra.mxu0 0.0
        %569 = vmatprep.subr.mxu0 0.0
        %570 = vmatpush1.msra.mxu0 0.0
        %571 = vmatprep.subr.mxu0 0.0
        %572 = vmatpush1.msra.mxu0 0.0
        %573 = vmatprep.subr.mxu0 0.0
        %574 = vmatpush1.msra.mxu0 0.0
        %575 = vmatprep.subr.mxu0 0.0
        %576 = vmatpush1.msra.mxu0 0.0
        %577 = vmatprep.subr.mxu0 0.0
        %578 = vmatpush1.msra.mxu0 0.0
        %579 = vmatprep.subr.mxu0 0.0
        %580 = vmatpush1.msra.mxu0 0.0
        %581 = vmatprep.subr.mxu0 0.0
        %582 = vmatpush1.msra.mxu0 0.0
        %583 = vmatprep.subr.mxu0 0.0
        %584 = vmatpush1.msra.mxu0 0.0
        %585 = vmatprep.subr.mxu0 0.0
        %586 = vmatpush1.msra.mxu0 0.0
        %587 = vmatprep.subr.mxu0 0.0
        %588 = vmatpush1.msra.mxu0 0.0
        %589 = vmatprep.subr.mxu0 0.0
        %590 = vmatpush1.msra.mxu0 0.0
        %591 = vmatprep.subr.mxu0 0.0
        %592 = vmatpush1.msra.mxu0 0.0
        %593 = vmatprep.mubr.f32.mxu0 0.0
        %594 = vmatmul.mubr.f32.gmra.mrb[0].mxu0 %v518
        %v595 = vpop.f32.mrb[0].mxu0
        %v596 = vadd.f32 0.0, %v595
        %v597 = vpop.f32.mrb[0].mxu0
        %598 = vmatprep.mubr.f32.mxu0 0.0
        %599 = vmatmul.mubr.f32.gmra.mrb[0].mxu0 %v521
        %v600 = vpop.f32.mrb[0].mxu0
        %v601 = vadd.f32 0.0, %v600
        %v602 = vpop.f32.mrb[0].mxu0
        %603 = vmatprep.mubr.f32.mxu0 0.0
        %604 = vmatmul.mubr.f32.gmra.mrb[0].mxu0 %v524
        %v605 = vpop.f32.mrb[0].mxu0
        %v606 = vadd.f32 0.0, %v605
        %v607 = vpop.f32.mrb[0].mxu0
        %608 = vmatprep.mubr.f32.mxu0 0.0
        %609 = vmatmul.mubr.f32.gmra.mrb[0].mxu0 %v527
        %v610 = vpop.f32.mrb[0].mxu0
        %v611 = vadd.f32 0.0, %v610
        %v612 = vpop.f32.mrb[0].mxu0
        %613 = vdwg.mxu0
        %vm614 = vcmp.gt.f32.partialorder %v596, 0.0
        %vm615 = vcmp.gt.f32.partialorder %v601, 0.0
        %vm616 = vcmp.gt.f32.partialorder %v606, 0.0
        %vm617 = vcmp.gt.f32.partialorder %v611, 0.0
        %v618 = vmin.f32 %v596, 0.0
        %v619 = vmin.f32 %v601, 0.0
        %v620 = vmin.f32 %v606, 0.0
        %v621 = vmin.f32 %v611, 0.0
        %v622 = vmul.f32 %v618, 1.442695
        %v623 = vpow.pop %v622
        %v624 = vmul.f32 %v619, 1.442695
        %v625 = vpow.pop %v624
        %v626 = vmul.f32 %v620, 1.442695
        %v627 = vpow.pop %v626
        %v628 = vmul.f32 %v621, 1.442695
        %v629 = vpow.pop %v628
        %v630 = vsub.f32 %v623, 1.0
        %v631 = vsub.f32 %v625, 1.0
        %v632 = vsub.f32 %v627, 1.0
        %v633 = vsub.f32 %v629, 1.0
        %v634 = vsel %vm614, %v596, %v630
        %v635 = vsel %vm615, %v601, %v631
        %v636 = vsel %vm616, %v606, %v632
        %v637 = vsel %vm617, %v611, %v633
        %vm638 = vcmask 31744
        %639 = vst.msk [vmem:[#allocation2] sm:$0xff] %vm638, 0.0
        %640 = vst.msk [vmem:[#allocation2 + $0x8] sm:$0xff] %vm638, 0.0
        %641 = vst.msk [vmem:[#allocation2 + $0x10] sm:$0xff] %vm638, 0.0
        %642 = vst.msk [vmem:[#allocation2 + $0x18] sm:$0xff] %vm638, 0.0
        %vm643 = vcmask 326944
        %644 = vst.msk [vmem:[#allocation2] sm:$0xff] %vm643, 0.0
        %645 = vst.msk [vmem:[#allocation2 + $0x8] sm:$0xff] %vm643, 0.0
        %646 = vst.msk [vmem:[#allocation2 + $0x10] sm:$0xff] %vm643, 0.0
        %647 = vst.msk [vmem:[#allocation2 + $0x18] sm:$0xff] %vm643, 0.0
        %648 = vxpose.xlu0.b32.start [1/16] %v634, 128
        %649 = vxpose.xlu0.b32.cont [2/16] %v635, 128
        %650 = vxpose.xlu0.b32.cont [3/16] %v636, 128
        %651 = vxpose.xlu0.b32.cont [4/16] %v637, 128
        %652 = vxpose.xlu0.b32.cont [5/16] 0.0, 128
        %653 = vxpose.xlu0.b32.cont [6/16] 0.0, 128
        %654 = vxpose.xlu0.b32.cont [7/16] 0.0, 128
        %655 = vxpose.xlu0.b32.cont [8/16] 0.0, 128
        %656 = vxpose.xlu0.b32.cont [9/16] 0.0, 128
        %657 = vxpose.xlu0.b32.cont [10/16] 0.0, 128
        %658 = vxpose.xlu0.b32.cont [11/16] 0.0, 128
        %659 = vxpose.xlu0.b32.cont [12/16] 0.0, 128
        %660 = vxpose.xlu0.b32.cont [13/16] 0.0, 128
        %661 = vxpose.xlu0.b32.cont [14/16] 0.0, 128
        %662 = vxpose.xlu0.b32.cont [15/16] 0.0, 128
        %663 = vxpose.xlu0.b32.end [16/16] 0.0, 128
        %v664 = vpop.trf.xlu0
        %v665 = vpop.trf.xlu0
        %v666 = vpop.trf.xlu0
        %v667 = vpop.trf.xlu0
        %v668 = vpop.trf.xlu0
        %v669 = vpop.trf.xlu0
        %v670 = vpop.trf.xlu0
        %v671 = vpop.trf.xlu0
        %v672 = vpop.trf.xlu0
        %v673 = vpop.trf.xlu0
        %v674 = vpop.trf.xlu0
        %v675 = vpop.trf.xlu0
        %v676 = vpop.trf.xlu0
        %v677 = vpop.trf.xlu0
        %v678 = vpop.trf.xlu0
        %v679 = vpop.trf.xlu0
        %684 = vrot.lane.b32.xlu0 %v664, 4
        %v685 = vpop.permute.xlu0 %684
        %686 = vrot.lane.b32.xlu0 %v665, 4
        %v687 = vpop.permute.xlu0 %686
        %688 = vrot.lane.b32.xlu0 %v666, 4
        %v689 = vpop.permute.xlu0 %688
        %690 = vrot.lane.b32.xlu0 %v667, 4
        %v691 = vpop.permute.xlu0 %690
        %vm696 = vcmask 293920
        %697 = vst.msk [vmem:[#allocation2] sm:$0xff] %vm696, %v685
        %698 = vst.msk [vmem:[#allocation2 + $0x8] sm:$0xff] %vm696, %v687
        %699 = vst.msk [vmem:[#allocation2 + $0x10] sm:$0xff] %vm696, %v689
        %700 = vst.msk [vmem:[#allocation2 + $0x18] sm:$0xff] %vm696, %v691
        %v701 = vld [vmem:[%s5] sm:$0xff]
        %v702 = vld [vmem:[%s5 + $0x8] sm:$0xff]
        %v703 = vld [vmem:[%s5 + $0x10] sm:$0xff]
        %v704 = vld [vmem:[%s5 + $0x18] sm:$0xff]
        %v705 = vld [vmem:[#allocation3] sm:$0xff]
        %v706 = vld [vmem:[#allocation3 + $0x8] sm:$0xff]
        %v707 = vld [vmem:[#allocation3 + $0x10] sm:$0xff]
        %v708 = vld [vmem:[#allocation3 + $0x18] sm:$0xff]
        %v709 = vld [vmem:[#allocation2] sm:$0xff]
        %v710 = vld [vmem:[#allocation2 + $0x8] sm:$0xff]
        %v711 = vld [vmem:[#allocation2 + $0x10] sm:$0xff]
        %v712 = vld [vmem:[#allocation2 + $0x18] sm:$0xff]
        %v714 = vsel %vm472, %v705, 0
        %v717 = vsel %vm472, %v706, 0
        %v720 = vsel %vm472, %v707, 0
        %v723 = vsel %vm472, %v708, 0
        %725 = vmatprep.subr.mxu0 0.0
        %726 = vmatpush1.msra.mxu0 %v709
        %727 = vmatprep.subr.mxu0 0.0
        %728 = vmatpush1.msra.mxu0 %v710
        %729 = vmatprep.subr.mxu0 0.0
        %730 = vmatpush1.msra.mxu0 %v711
        %731 = vmatprep.subr.mxu0 0.0
        %732 = vmatpush1.msra.mxu0 %v712
        %733 = vmatprep.subr.mxu0 0.0
        %734 = vmatpush1.msra.mxu0 0.0
        %735 = vmatprep.subr.mxu0 0.0
        %736 = vmatpush1.msra.mxu0 0.0
        %737 = vmatprep.subr.mxu0 0.0
        %738 = vmatpush1.msra.mxu0 0.0
        %739 = vmatprep.subr.mxu0 0.0
        %740 = vmatpush1.msra.mxu0 0.0
        %741 = vmatprep.subr.mxu0 0.0
        %742 = vmatpush1.msra.mxu0 0.0
        %743 = vmatprep.subr.mxu0 0.0
        %744 = vmatpush1.msra.mxu0 0.0
        %745 = vmatprep.subr.mxu0 0.0
        %746 = vmatpush1.msra.mxu0 0.0
        %747 = vmatprep.subr.mxu0 0.0
        %748 = vmatpush1.msra.mxu0 0.0
        %749 = vmatprep.subr.mxu0 0.0
        %750 = vmatpush1.msra.mxu0 0.0
        %751 = vmatprep.subr.mxu0 0.0
        %752 = vmatpush1.msra.mxu0 0.0
        %753 = vmatprep.subr.mxu0 0.0
        %754 = vmatpush1.msra.mxu0 0.0
        %755 = vmatprep.subr.mxu0 0.0
        %756 = vmatpush1.msra.mxu0 0.0
        %757 = vmatprep.subr.mxu0 0.0
        %758 = vmatpush1.msra.mxu0 0.0
        %759 = vmatprep.subr.mxu0 0.0
        %760 = vmatpush1.msra.mxu0 0.0
        %761 = vmatprep.subr.mxu0 0.0
        %762 = vmatpush1.msra.mxu0 0.0
        %763 = vmatprep.subr.mxu0 0.0
        %764 = vmatpush1.msra.mxu0 0.0
        %765 = vmatprep.subr.mxu0 0.0
        %766 = vmatpush1.msra.mxu0 0.0
        %767 = vmatprep.subr.mxu0 0.0
        %768 = vmatpush1.msra.mxu0 0.0
        %769 = vmatprep.subr.mxu0 0.0
        %770 = vmatpush1.msra.mxu0 0.0
        %771 = vmatprep.subr.mxu0 0.0
        %772 = vmatpush1.msra.mxu0 0.0
        %773 = vmatprep.subr.mxu0 0.0
        %774 = vmatpush1.msra.mxu0 0.0
        %775 = vmatprep.subr.mxu0 0.0
        %776 = vmatpush1.msra.mxu0 0.0
        %777 = vmatprep.subr.mxu0 0.0
        %778 = vmatpush1.msra.mxu0 0.0
        %779 = vmatprep.subr.mxu0 0.0
        %780 = vmatpush1.msra.mxu0 0.0
        %781 = vmatprep.subr.mxu0 0.0
        %782 = vmatpush1.msra.mxu0 0.0
        %783 = vmatprep.subr.mxu0 0.0
        %784 = vmatpush1.msra.mxu0 0.0
        %785 = vmatprep.subr.mxu0 0.0
        %786 = vmatpush1.msra.mxu0 0.0
        %787 = vmatprep.subr.mxu0 0.0
        %788 = vmatpush1.msra.mxu0 0.0
        %789 = vmatprep.mubr.f32.mxu0 0.0
        %790 = vmatmul.mubr.f32.gmra.mrb[0].mxu0 %v714
        %v791 = vpop.f32.mrb[0].mxu0
        %v792 = vadd.f32 0.0, %v791
        %v793 = vpop.f32.mrb[0].mxu0
        %794 = vmatprep.mubr.f32.mxu0 0.0
        %795 = vmatmul.mubr.f32.gmra.mrb[0].mxu0 %v717
        %v796 = vpop.f32.mrb[0].mxu0
        %v797 = vadd.f32 0.0, %v796
        %v798 = vpop.f32.mrb[0].mxu0
        %799 = vmatprep.mubr.f32.mxu0 0.0
        %800 = vmatmul.mubr.f32.gmra.mrb[0].mxu0 %v720
        %v801 = vpop.f32.mrb[0].mxu0
        %v802 = vadd.f32 0.0, %v801
        %v803 = vpop.f32.mrb[0].mxu0
        %804 = vmatprep.mubr.f32.mxu0 0.0
        %805 = vmatmul.mubr.f32.gmra.mrb[0].mxu0 %v723
        %v806 = vpop.f32.mrb[0].mxu0
        %v807 = vadd.f32 0.0, %v806
        %v808 = vpop.f32.mrb[0].mxu0
        %809 = vdwg.mxu0
        %811 = vset.pattern.permute.xlu0 0
        %812 = vperm.xlu0 %811, %v701
        %v813 = vpop.permute.xlu0 %812
        %816 = vset.pattern.permute.xlu0 0
        %817 = vperm.xlu0 %816, %v702
        %v818 = vpop.permute.xlu0 %817
        %821 = vset.pattern.permute.xlu0 0
        %822 = vperm.xlu0 %821, %v703
        %v823 = vpop.permute.xlu0 %822
        %826 = vset.pattern.permute.xlu0 0
        %827 = vperm.xlu0 %826, %v704
        %v828 = vpop.permute.xlu0 %827
        %v830 = vadd.f32 %v813, %v792
        %v831 = vadd.f32 %v818, %v797
        %v832 = vadd.f32 %v823, %v802
        %v833 = vadd.f32 %v828, %v807
        %s834 = scalar_lea.vmem [#allocation3], 32
        %v835 = vld [vmem:[%s834] sm:$0xff]
        %v836 = vld [vmem:[%s834 + $0x8] sm:$0xff]
        %v837 = vld [vmem:[%s834 + $0x10] sm:$0xff]
        %v838 = vld [vmem:[%s834 + $0x18] sm:$0xff]
        %843 = vrot.lane.b32.xlu0 %v709, 127
        %v844 = vpop.permute.xlu0 %843
        %845 = vrot.lane.b32.xlu0 %v710, 127
        %v846 = vpop.permute.xlu0 %845
        %847 = vrot.lane.b32.xlu0 %v711, 127
        %v848 = vpop.permute.xlu0 %847
        %849 = vrot.lane.b32.xlu0 %v712, 127
        %v850 = vpop.permute.xlu0 %849
        %v856 = vsel %vm472, %v835, 0
        %v859 = vsel %vm472, %v836, 0
        %v862 = vsel %vm472, %v837, 0
        %v865 = vsel %vm472, %v838, 0
        %867 = vmatprep.subr.mxu0 0.0
        %868 = vmatpush1.msra.mxu0 %v844
        %869 = vmatprep.subr.mxu0 0.0
        %870 = vmatpush1.msra.mxu0 %v846
        %871 = vmatprep.subr.mxu0 0.0
        %872 = vmatpush1.msra.mxu0 %v848
        %873 = vmatprep.subr.mxu0 0.0
        %874 = vmatpush1.msra.mxu0 %v850
        %875 = vmatprep.subr.mxu0 0.0
        %876 = vmatpush1.msra.mxu0 0.0
        %877 = vmatprep.subr.mxu0 0.0
        %878 = vmatpush1.msra.mxu0 0.0
        %879 = vmatprep.subr.mxu0 0.0
        %880 = vmatpush1.msra.mxu0 0.0
        %881 = vmatprep.subr.mxu0 0.0
        %882 = vmatpush1.msra.mxu0 0.0
        %883 = vmatprep.subr.mxu0 0.0
        %884 = vmatpush1.msra.mxu0 0.0
        %885 = vmatprep.subr.mxu0 0.0
        %886 = vmatpush1.msra.mxu0 0.0
        %887 = vmatprep.subr.mxu0 0.0
        %888 = vmatpush1.msra.mxu0 0.0
        %889 = vmatprep.subr.mxu0 0.0
        %890 = vmatpush1.msra.mxu0 0.0
        %891 = vmatprep.subr.mxu0 0.0
        %892 = vmatpush1.msra.mxu0 0.0
        %893 = vmatprep.subr.mxu0 0.0
        %894 = vmatpush1.msra.mxu0 0.0
        %895 = vmatprep.subr.mxu0 0.0
        %896 = vmatpush1.msra.mxu0 0.0
        %897 = vmatprep.subr.mxu0 0.0
        %898 = vmatpush1.msra.mxu0 0.0
        %899 = vmatprep.subr.mxu0 0.0
        %900 = vmatpush1.msra.mxu0 0.0
        %901 = vmatprep.subr.mxu0 0.0
        %902 = vmatpush1.msra.mxu0 0.0
        %903 = vmatprep.subr.mxu0 0.0
        %904 = vmatpush1.msra.mxu0 0.0
        %905 = vmatprep.subr.mxu0 0.0
        %906 = vmatpush1.msra.mxu0 0.0
        %907 = vmatprep.subr.mxu0 0.0
        %908 = vmatpush1.msra.mxu0 0.0
        %909 = vmatprep.subr.mxu0 0.0
        %910 = vmatpush1.msra.mxu0 0.0
        %911 = vmatprep.subr.mxu0 0.0
        %912 = vmatpush1.msra.mxu0 0.0
        %913 = vmatprep.subr.mxu0 0.0
        %914 = vmatpush1.msra.mxu0 0.0
        %915 = vmatprep.subr.mxu0 0.0
        %916 = vmatpush1.msra.mxu0 0.0
        %917 = vmatprep.subr.mxu0 0.0
        %918 = vmatpush1.msra.mxu0 0.0
        %919 = vmatprep.subr.mxu0 0.0
        %920 = vmatpush1.msra.mxu0 0.0
        %921 = vmatprep.subr.mxu0 0.0
        %922 = vmatpush1.msra.mxu0 0.0
        %923 = vmatprep.subr.mxu0 0.0
        %924 = vmatpush1.msra.mxu0 0.0
        %925 = vmatprep.subr.mxu0 0.0
        %926 = vmatpush1.msra.mxu0 0.0
        %927 = vmatprep.subr.mxu0 0.0
        %928 = vmatpush1.msra.mxu0 0.0
        %929 = vmatprep.subr.mxu0 0.0
        %930 = vmatpush1.msra.mxu0 0.0
        %931 = vmatprep.mubr.f32.mxu0 0.0
        %932 = vmatmul.mubr.f32.gmra.mrb[0].mxu0 %v856
        %v933 = vpop.f32.mrb[0].mxu0
        %v934 = vadd.f32 0.0, %v933
        %v935 = vpop.f32.mrb[0].mxu0
        %936 = vmatprep.mubr.f32.mxu0 0.0
        %937 = vmatmul.mubr.f32.gmra.mrb[0].mxu0 %v859
        %v938 = vpop.f32.mrb[0].mxu0
        %v939 = vadd.f32 0.0, %v938
        %v940 = vpop.f32.mrb[0].mxu0
        %941 = vmatprep.mubr.f32.mxu0 0.0
        %942 = vmatmul.mubr.f32.gmra.mrb[0].mxu0 %v862
        %v943 = vpop.f32.mrb[0].mxu0
        %v944 = vadd.f32 0.0, %v943
        %v945 = vpop.f32.mrb[0].mxu0
        %946 = vmatprep.mubr.f32.mxu0 0.0
        %947 = vmatmul.mubr.f32.gmra.mrb[0].mxu0 %v865
        %v948 = vpop.f32.mrb[0].mxu0
        %v949 = vadd.f32 0.0, %v948
        %v950 = vpop.f32.mrb[0].mxu0
        %951 = vdwg.mxu0
        %v952 = vadd.f32 %v830, %v934
        %v953 = vadd.f32 %v831, %v939
        %v954 = vadd.f32 %v832, %v944
        %v955 = vadd.f32 %v833, %v949
        %s956 = scalar_lea.vmem [#allocation3], 64
        %v957 = vld [vmem:[%s956] sm:$0xff]
        %v958 = vld [vmem:[%s956 + $0x8] sm:$0xff]
        %v959 = vld [vmem:[%s956 + $0x10] sm:$0xff]
        %v960 = vld [vmem:[%s956 + $0x18] sm:$0xff]
        %961 = vrot.lane.b32.xlu0 %v709, 126
        %v962 = vpop.permute.xlu0 %961
        %963 = vrot.lane.b32.xlu0 %v710, 126
        %v964 = vpop.permute.xlu0 %963
        %965 = vrot.lane.b32.xlu0 %v711, 126
        %v966 = vpop.permute.xlu0 %965
        %967 = vrot.lane.b32.xlu0 %v712, 126
        %v968 = vpop.permute.xlu0 %967
        %v974 = vsel %vm472, %v957, 0
        %v977 = vsel %vm472, %v958, 0
        %v980 = vsel %vm472, %v959, 0
        %v983 = vsel %vm472, %v960, 0
        %985 = vmatprep.subr.mxu0 0.0
        %986 = vmatpush1.msra.mxu0 %v962
        %987 = vmatprep.subr.mxu0 0.0
        %988 = vmatpush1.msra.mxu0 %v964
        %989 = vmatprep.subr.mxu0 0.0
        %990 = vmatpush1.msra.mxu0 %v966
        %991 = vmatprep.subr.mxu0 0.0
        %992 = vmatpush1.msra.mxu0 %v968
        %993 = vmatprep.subr.mxu0 0.0
        %994 = vmatpush1.msra.mxu0 0.0
        %995 = vmatprep.subr.mxu0 0.0
        %996 = vmatpush1.msra.mxu0 0.0
        %997 = vmatprep.subr.mxu0 0.0
        %998 = vmatpush1.msra.mxu0 0.0
        %999 = vmatprep.subr.mxu0 0.0
        %1000 = vmatpush1.msra.mxu0 0.0
        %1001 = vmatprep.subr.mxu0 0.0
        %1002 = vmatpush1.msra.mxu0 0.0
        %1003 = vmatprep.subr.mxu0 0.0
        %1004 = vmatpush1.msra.mxu0 0.0
        %1005 = vmatprep.subr.mxu0 0.0
        %1006 = vmatpush1.msra.mxu0 0.0
        %1007 = vmatprep.subr.mxu0 0.0
        %1008 = vmatpush1.msra.mxu0 0.0
        %1009 = vmatprep.subr.mxu0 0.0
        %1010 = vmatpush1.msra.mxu0 0.0
        %1011 = vmatprep.subr.mxu0 0.0
        %1012 = vmatpush1.msra.mxu0 0.0
        %1013 = vmatprep.subr.mxu0 0.0
        %1014 = vmatpush1.msra.mxu0 0.0
        %1015 = vmatprep.subr.mxu0 0.0
        %1016 = vmatpush1.msra.mxu0 0.0
        %1017 = vmatprep.subr.mxu0 0.0
        %1018 = vmatpush1.msra.mxu0 0.0
        %1019 = vmatprep.subr.mxu0 0.0
        %1020 = vmatpush1.msra.mxu0 0.0
        %1021 = vmatprep.subr.mxu0 0.0
        %1022 = vmatpush1.msra.mxu0 0.0
        %1023 = vmatprep.subr.mxu0 0.0
        %1024 = vmatpush1.msra.mxu0 0.0
        %1025 = vmatprep.subr.mxu0 0.0
        %1026 = vmatpush1.msra.mxu0 0.0
        %1027 = vmatprep.subr.mxu0 0.0
        %1028 = vmatpush1.msra.mxu0 0.0
        %1029 = vmatprep.subr.mxu0 0.0
        %1030 = vmatpush1.msra.mxu0 0.0
        %1031 = vmatprep.subr.mxu0 0.0
        %1032 = vmatpush1.msra.mxu0 0.0
        %1033 = vmatprep.subr.mxu0 0.0
        %1034 = vmatpush1.msra.mxu0 0.0
        %1035 = vmatprep.subr.mxu0 0.0
        %1036 = vmatpush1.msra.mxu0 0.0
        %1037 = vmatprep.subr.mxu0 0.0
        %1038 = vmatpush1.msra.mxu0 0.0
        %1039 = vmatprep.subr.mxu0 0.0
        %1040 = vmatpush1.msra.mxu0 0.0
        %1041 = vmatprep.subr.mxu0 0.0
        %1042 = vmatpush1.msra.mxu0 0.0
        %1043 = vmatprep.subr.mxu0 0.0
        %1044 = vmatpush1.msra.mxu0 0.0
        %1045 = vmatprep.subr.mxu0 0.0
        %1046 = vmatpush1.msra.mxu0 0.0
        %1047 = vmatprep.subr.mxu0 0.0
        %1048 = vmatpush1.msra.mxu0 0.0
        %1049 = vmatprep.mubr.f32.mxu0 0.0
        %1050 = vmatmul.mubr.f32.gmra.mrb[0].mxu0 %v974
        %v1051 = vpop.f32.mrb[0].mxu0
        %v1052 = vadd.f32 0.0, %v1051
        %v1053 = vpop.f32.mrb[0].mxu0
        %1054 = vmatprep.mubr.f32.mxu0 0.0
        %1055 = vmatmul.mubr.f32.gmra.mrb[0].mxu0 %v977
        %v1056 = vpop.f32.mrb[0].mxu0
        %v1057 = vadd.f32 0.0, %v1056
        %v1058 = vpop.f32.mrb[0].mxu0
        %1059 = vmatprep.mubr.f32.mxu0 0.0
        %1060 = vmatmul.mubr.f32.gmra.mrb[0].mxu0 %v980
        %v1061 = vpop.f32.mrb[0].mxu0
        %v1062 = vadd.f32 0.0, %v1061
        %v1063 = vpop.f32.mrb[0].mxu0
        %1064 = vmatprep.mubr.f32.mxu0 0.0
        %1065 = vmatmul.mubr.f32.gmra.mrb[0].mxu0 %v983
        %v1066 = vpop.f32.mrb[0].mxu0
        %v1067 = vadd.f32 0.0, %v1066
        %v1068 = vpop.f32.mrb[0].mxu0
        %1069 = vdwg.mxu0
        %v1070 = vadd.f32 %v952, %v1052
        %v1071 = vadd.f32 %v953, %v1057
        %v1072 = vadd.f32 %v954, %v1062
        %v1073 = vadd.f32 %v955, %v1067
        %s1074 = scalar_lea.vmem [#allocation3], 96
        %v1075 = vld [vmem:[%s1074] sm:$0xff]
        %v1076 = vld [vmem:[%s1074 + $0x8] sm:$0xff]
        %v1077 = vld [vmem:[%s1074 + $0x10] sm:$0xff]
        %v1078 = vld [vmem:[%s1074 + $0x18] sm:$0xff]
        %1079 = vrot.lane.b32.xlu0 %v709, 125
        %v1080 = vpop.permute.xlu0 %1079
        %1081 = vrot.lane.b32.xlu0 %v710, 125
        %v1082 = vpop.permute.xlu0 %1081
        %1083 = vrot.lane.b32.xlu0 %v711, 125
        %v1084 = vpop.permute.xlu0 %1083
        %1085 = vrot.lane.b32.xlu0 %v712, 125
        %v1086 = vpop.permute.xlu0 %1085
        %v1092 = vsel %vm472, %v1075, 0
        %v1095 = vsel %vm472, %v1076, 0
        %v1098 = vsel %vm472, %v1077, 0
        %v1101 = vsel %vm472, %v1078, 0
        %1103 = vmatprep.subr.mxu0 0.0
        %1104 = vmatpush1.msra.mxu0 %v1080
        %1105 = vmatprep.subr.mxu0 0.0
        %1106 = vmatpush1.msra.mxu0 %v1082
        %1107 = vmatprep.subr.mxu0 0.0
        %1108 = vmatpush1.msra.mxu0 %v1084
        %1109 = vmatprep.subr.mxu0 0.0
        %1110 = vmatpush1.msra.mxu0 %v1086
        %1111 = vmatprep.subr.mxu0 0.0
        %1112 = vmatpush1.msra.mxu0 0.0
        %1113 = vmatprep.subr.mxu0 0.0
        %1114 = vmatpush1.msra.mxu0 0.0
        %1115 = vmatprep.subr.mxu0 0.0
        %1116 = vmatpush1.msra.mxu0 0.0
        %1117 = vmatprep.subr.mxu0 0.0
        %1118 = vmatpush1.msra.mxu0 0.0
        %1119 = vmatprep.subr.mxu0 0.0
        %1120 = vmatpush1.msra.mxu0 0.0
        %1121 = vmatprep.subr.mxu0 0.0
        %1122 = vmatpush1.msra.mxu0 0.0
        %1123 = vmatprep.subr.mxu0 0.0
        %1124 = vmatpush1.msra.mxu0 0.0
        %1125 = vmatprep.subr.mxu0 0.0
        %1126 = vmatpush1.msra.mxu0 0.0
        %1127 = vmatprep.subr.mxu0 0.0
        %1128 = vmatpush1.msra.mxu0 0.0
        %1129 = vmatprep.subr.mxu0 0.0
        %1130 = vmatpush1.msra.mxu0 0.0
        %1131 = vmatprep.subr.mxu0 0.0
        %1132 = vmatpush1.msra.mxu0 0.0
        %1133 = vmatprep.subr.mxu0 0.0
        %1134 = vmatpush1.msra.mxu0 0.0
        %1135 = vmatprep.subr.mxu0 0.0
        %1136 = vmatpush1.msra.mxu0 0.0
        %1137 = vmatprep.subr.mxu0 0.0
        %1138 = vmatpush1.msra.mxu0 0.0
        %1139 = vmatprep.subr.mxu0 0.0
        %1140 = vmatpush1.msra.mxu0 0.0
        %1141 = vmatprep.subr.mxu0 0.0
        %1142 = vmatpush1.msra.mxu0 0.0
        %1143 = vmatprep.subr.mxu0 0.0
        %1144 = vmatpush1.msra.mxu0 0.0
        %1145 = vmatprep.subr.mxu0 0.0
        %1146 = vmatpush1.msra.mxu0 0.0
        %1147 = vmatprep.subr.mxu0 0.0
        %1148 = vmatpush1.msra.mxu0 0.0
        %1149 = vmatprep.subr.mxu0 0.0
        %1150 = vmatpush1.msra.mxu0 0.0
        %1151 = vmatprep.subr.mxu0 0.0
        %1152 = vmatpush1.msra.mxu0 0.0
        %1153 = vmatprep.subr.mxu0 0.0
        %1154 = vmatpush1.msra.mxu0 0.0
        %1155 = vmatprep.subr.mxu0 0.0
        %1156 = vmatpush1.msra.mxu0 0.0
        %1157 = vmatprep.subr.mxu0 0.0
        %1158 = vmatpush1.msra.mxu0 0.0
        %1159 = vmatprep.subr.mxu0 0.0
        %1160 = vmatpush1.msra.mxu0 0.0
        %1161 = vmatprep.subr.mxu0 0.0
        %1162 = vmatpush1.msra.mxu0 0.0
        %1163 = vmatprep.subr.mxu0 0.0
        %1164 = vmatpush1.msra.mxu0 0.0
        %1165 = vmatprep.subr.mxu0 0.0
        %1166 = vmatpush1.msra.mxu0 0.0
        %1167 = vmatprep.mubr.f32.mxu0 0.0
        %1168 = vmatmul.mubr.f32.gmra.mrb[0].mxu0 %v1092
        %v1169 = vpop.f32.mrb[0].mxu0
        %v1170 = vadd.f32 0.0, %v1169
        %v1171 = vpop.f32.mrb[0].mxu0
        %1172 = vmatprep.mubr.f32.mxu0 0.0
        %1173 = vmatmul.mubr.f32.gmra.mrb[0].mxu0 %v1095
        %v1174 = vpop.f32.mrb[0].mxu0
        %v1175 = vadd.f32 0.0, %v1174
        %v1176 = vpop.f32.mrb[0].mxu0
        %1177 = vmatprep.mubr.f32.mxu0 0.0
        %1178 = vmatmul.mubr.f32.gmra.mrb[0].mxu0 %v1098
        %v1179 = vpop.f32.mrb[0].mxu0
        %v1180 = vadd.f32 0.0, %v1179
        %v1181 = vpop.f32.mrb[0].mxu0
        %1182 = vmatprep.mubr.f32.mxu0 0.0
        %1183 = vmatmul.mubr.f32.gmra.mrb[0].mxu0 %v1101
        %v1184 = vpop.f32.mrb[0].mxu0
        %v1185 = vadd.f32 0.0, %v1184
        %v1186 = vpop.f32.mrb[0].mxu0
        %1187 = vdwg.mxu0
        %v1188 = vadd.f32 %v1070, %v1170
        %v1189 = vadd.f32 %v1071, %v1175
        %v1190 = vadd.f32 %v1072, %v1180
        %v1191 = vadd.f32 %v1073, %v1185
        %s1192 = scalar_lea.vmem [#allocation3], 128
        %v1193 = vld [vmem:[%s1192] sm:$0xff]
        %v1194 = vld [vmem:[%s1192 + $0x8] sm:$0xff]
        %v1195 = vld [vmem:[%s1192 + $0x10] sm:$0xff]
        %v1196 = vld [vmem:[%s1192 + $0x18] sm:$0xff]
        %1197 = vrot.lane.b32.xlu0 %v709, 124
        %v1198 = vpop.permute.xlu0 %1197
        %1199 = vrot.lane.b32.xlu0 %v710, 124
        %v1200 = vpop.permute.xlu0 %1199
        %1201 = vrot.lane.b32.xlu0 %v711, 124
        %v1202 = vpop.permute.xlu0 %1201
        %1203 = vrot.lane.b32.xlu0 %v712, 124
        %v1204 = vpop.permute.xlu0 %1203
        %v1210 = vsel %vm472, %v1193, 0
        %v1213 = vsel %vm472, %v1194, 0
        %v1216 = vsel %vm472, %v1195, 0
        %v1219 = vsel %vm472, %v1196, 0
        %1221 = vmatprep.subr.mxu0 0.0
        %1222 = vmatpush1.msra.mxu0 %v1198
        %1223 = vmatprep.subr.mxu0 0.0
        %1224 = vmatpush1.msra.mxu0 %v1200
        %1225 = vmatprep.subr.mxu0 0.0
        %1226 = vmatpush1.msra.mxu0 %v1202
        %1227 = vmatprep.subr.mxu0 0.0
        %1228 = vmatpush1.msra.mxu0 %v1204
        %1229 = vmatprep.subr.mxu0 0.0
        %1230 = vmatpush1.msra.mxu0 0.0
        %1231 = vmatprep.subr.mxu0 0.0
        %1232 = vmatpush1.msra.mxu0 0.0
        %1233 = vmatprep.subr.mxu0 0.0
        %1234 = vmatpush1.msra.mxu0 0.0
        %1235 = vmatprep.subr.mxu0 0.0
        %1236 = vmatpush1.msra.mxu0 0.0
        %1237 = vmatprep.subr.mxu0 0.0
        %1238 = vmatpush1.msra.mxu0 0.0
        %1239 = vmatprep.subr.mxu0 0.0
        %1240 = vmatpush1.msra.mxu0 0.0
        %1241 = vmatprep.subr.mxu0 0.0
        %1242 = vmatpush1.msra.mxu0 0.0
        %1243 = vmatprep.subr.mxu0 0.0
        %1244 = vmatpush1.msra.mxu0 0.0
        %1245 = vmatprep.subr.mxu0 0.0
        %1246 = vmatpush1.msra.mxu0 0.0
        %1247 = vmatprep.subr.mxu0 0.0
        %1248 = vmatpush1.msra.mxu0 0.0
        %1249 = vmatprep.subr.mxu0 0.0
        %1250 = vmatpush1.msra.mxu0 0.0
        %1251 = vmatprep.subr.mxu0 0.0
        %1252 = vmatpush1.msra.mxu0 0.0
        %1253 = vmatprep.subr.mxu0 0.0
        %1254 = vmatpush1.msra.mxu0 0.0
        %1255 = vmatprep.subr.mxu0 0.0
        %1256 = vmatpush1.msra.mxu0 0.0
        %1257 = vmatprep.subr.mxu0 0.0
        %1258 = vmatpush1.msra.mxu0 0.0
        %1259 = vmatprep.subr.mxu0 0.0
        %1260 = vmatpush1.msra.mxu0 0.0
        %1261 = vmatprep.subr.mxu0 0.0
        %1262 = vmatpush1.msra.mxu0 0.0
        %1263 = vmatprep.subr.mxu0 0.0
        %1264 = vmatpush1.msra.mxu0 0.0
        %1265 = vmatprep.subr.mxu0 0.0
        %1266 = vmatpush1.msra.mxu0 0.0
        %1267 = vmatprep.subr.mxu0 0.0
        %1268 = vmatpush1.msra.mxu0 0.0
        %1269 = vmatprep.subr.mxu0 0.0
        %1270 = vmatpush1.msra.mxu0 0.0
        %1271 = vmatprep.subr.mxu0 0.0
        %1272 = vmatpush1.msra.mxu0 0.0
        %1273 = vmatprep.subr.mxu0 0.0
        %1274 = vmatpush1.msra.mxu0 0.0
        %1275 = vmatprep.subr.mxu0 0.0
        %1276 = vmatpush1.msra.mxu0 0.0
        %1277 = vmatprep.subr.mxu0 0.0
        %1278 = vmatpush1.msra.mxu0 0.0
        %1279 = vmatprep.subr.mxu0 0.0
        %1280 = vmatpush1.msra.mxu0 0.0
        %1281 = vmatprep.subr.mxu0 0.0
        %1282 = vmatpush1.msra.mxu0 0.0
        %1283 = vmatprep.subr.mxu0 0.0
        %1284 = vmatpush1.msra.mxu0 0.0
        %1285 = vmatprep.mubr.f32.mxu0 0.0
        %1286 = vmatmul.mubr.f32.gmra.mrb[0].mxu0 %v1210
        %v1287 = vpop.f32.mrb[0].mxu0
        %v1288 = vadd.f32 0.0, %v1287
        %v1289 = vpop.f32.mrb[0].mxu0
        %1290 = vmatprep.mubr.f32.mxu0 0.0
        %1291 = vmatmul.mubr.f32.gmra.mrb[0].mxu0 %v1213
        %v1292 = vpop.f32.mrb[0].mxu0
        %v1293 = vadd.f32 0.0, %v1292
        %v1294 = vpop.f32.mrb[0].mxu0
        %1295 = vmatprep.mubr.f32.mxu0 0.0
        %1296 = vmatmul.mubr.f32.gmra.mrb[0].mxu0 %v1216
        %v1297 = vpop.f32.mrb[0].mxu0
        %v1298 = vadd.f32 0.0, %v1297
        %v1299 = vpop.f32.mrb[0].mxu0
        %1300 = vmatprep.mubr.f32.mxu0 0.0
        %1301 = vmatmul.mubr.f32.gmra.mrb[0].mxu0 %v1219
        %v1302 = vpop.f32.mrb[0].mxu0
        %v1303 = vadd.f32 0.0, %v1302
        %v1304 = vpop.f32.mrb[0].mxu0
        %1305 = vdwg.mxu0
        %v1306 = vadd.f32 %v1188, %v1288
        %v1307 = vadd.f32 %v1189, %v1293
        %v1308 = vadd.f32 %v1190, %v1298
        %v1309 = vadd.f32 %v1191, %v1303
        %s1310 = scalar_lea.vmem [#allocation3], 160
        %v1311 = vld [vmem:[%s1310] sm:$0xff]
        %v1312 = vld [vmem:[%s1310 + $0x8] sm:$0xff]
        %v1313 = vld [vmem:[%s1310 + $0x10] sm:$0xff]
        %v1314 = vld [vmem:[%s1310 + $0x18] sm:$0xff]
        %1315 = vrot.lane.b32.xlu0 %v709, 123
        %v1316 = vpop.permute.xlu0 %1315
        %1317 = vrot.lane.b32.xlu0 %v710, 123
        %v1318 = vpop.permute.xlu0 %1317
        %1319 = vrot.lane.b32.xlu0 %v711, 123
        %v1320 = vpop.permute.xlu0 %1319
        %1321 = vrot.lane.b32.xlu0 %v712, 123
        %v1322 = vpop.permute.xlu0 %1321
        %v1328 = vsel %vm472, %v1311, 0
        %v1331 = vsel %vm472, %v1312, 0
        %v1334 = vsel %vm472, %v1313, 0
        %v1337 = vsel %vm472, %v1314, 0
        %1339 = vmatprep.subr.mxu0 0.0
        %1340 = vmatpush1.msra.mxu0 %v1316
        %1341 = vmatprep.subr.mxu0 0.0
        %1342 = vmatpush1.msra.mxu0 %v1318
        %1343 = vmatprep.subr.mxu0 0.0
        %1344 = vmatpush1.msra.mxu0 %v1320
        %1345 = vmatprep.subr.mxu0 0.0
        %1346 = vmatpush1.msra.mxu0 %v1322
        %1347 = vmatprep.subr.mxu0 0.0
        %1348 = vmatpush1.msra.mxu0 0.0
        %1349 = vmatprep.subr.mxu0 0.0
        %1350 = vmatpush1.msra.mxu0 0.0
        %1351 = vmatprep.subr.mxu0 0.0
        %1352 = vmatpush1.msra.mxu0 0.0
        %1353 = vmatprep.subr.mxu0 0.0
        %1354 = vmatpush1.msra.mxu0 0.0
        %1355 = vmatprep.subr.mxu0 0.0
        %1356 = vmatpush1.msra.mxu0 0.0
        %1357 = vmatprep.subr.mxu0 0.0
        %1358 = vmatpush1.msra.mxu0 0.0
        %1359 = vmatprep.subr.mxu0 0.0
        %1360 = vmatpush1.msra.mxu0 0.0
        %1361 = vmatprep.subr.mxu0 0.0
        %1362 = vmatpush1.msra.mxu0 0.0
        %1363 = vmatprep.subr.mxu0 0.0
        %1364 = vmatpush1.msra.mxu0 0.0
        %1365 = vmatprep.subr.mxu0 0.0
        %1366 = vmatpush1.msra.mxu0 0.0
        %1367 = vmatprep.subr.mxu0 0.0
        %1368 = vmatpush1.msra.mxu0 0.0
        %1369 = vmatprep.subr.mxu0 0.0
        %1370 = vmatpush1.msra.mxu0 0.0
        %1371 = vmatprep.subr.mxu0 0.0
        %1372 = vmatpush1.msra.mxu0 0.0
        %1373 = vmatprep.subr.mxu0 0.0
        %1374 = vmatpush1.msra.mxu0 0.0
        %1375 = vmatprep.subr.mxu0 0.0
        %1376 = vmatpush1.msra.mxu0 0.0
        %1377 = vmatprep.subr.mxu0 0.0
        %1378 = vmatpush1.msra.mxu0 0.0
        %1379 = vmatprep.subr.mxu0 0.0
        %1380 = vmatpush1.msra.mxu0 0.0
        %1381 = vmatprep.subr.mxu0 0.0
        %1382 = vmatpush1.msra.mxu0 0.0
        %1383 = vmatprep.subr.mxu0 0.0
        %1384 = vmatpush1.msra.mxu0 0.0
        %1385 = vmatprep.subr.mxu0 0.0
        %1386 = vmatpush1.msra.mxu0 0.0
        %1387 = vmatprep.subr.mxu0 0.0
        %1388 = vmatpush1.msra.mxu0 0.0
        %1389 = vmatprep.subr.mxu0 0.0
        %1390 = vmatpush1.msra.mxu0 0.0
        %1391 = vmatprep.subr.mxu0 0.0
        %1392 = vmatpush1.msra.mxu0 0.0
        %1393 = vmatprep.subr.mxu0 0.0
        %1394 = vmatpush1.msra.mxu0 0.0
        %1395 = vmatprep.subr.mxu0 0.0
        %1396 = vmatpush1.msra.mxu0 0.0
        %1397 = vmatprep.subr.mxu0 0.0
        %1398 = vmatpush1.msra.mxu0 0.0
        %1399 = vmatprep.subr.mxu0 0.0
        %1400 = vmatpush1.msra.mxu0 0.0
        %1401 = vmatprep.subr.mxu0 0.0
        %1402 = vmatpush1.msra.mxu0 0.0
        %1403 = vmatprep.mubr.f32.mxu0 0.0
        %1404 = vmatmul.mubr.f32.gmra.mrb[0].mxu0 %v1328
        %v1405 = vpop.f32.mrb[0].mxu0
        %v1406 = vadd.f32 0.0, %v1405
        %v1407 = vpop.f32.mrb[0].mxu0
        %1408 = vmatprep.mubr.f32.mxu0 0.0
        %1409 = vmatmul.mubr.f32.gmra.mrb[0].mxu0 %v1331
        %v1410 = vpop.f32.mrb[0].mxu0
        %v1411 = vadd.f32 0.0, %v1410
        %v1412 = vpop.f32.mrb[0].mxu0
        %1413 = vmatprep.mubr.f32.mxu0 0.0
        %1414 = vmatmul.mubr.f32.gmra.mrb[0].mxu0 %v1334
        %v1415 = vpop.f32.mrb[0].mxu0
        %v1416 = vadd.f32 0.0, %v1415
        %v1417 = vpop.f32.mrb[0].mxu0
        %1418 = vmatprep.mubr.f32.mxu0 0.0
        %1419 = vmatmul.mubr.f32.gmra.mrb[0].mxu0 %v1337
        %v1420 = vpop.f32.mrb[0].mxu0
        %v1421 = vadd.f32 0.0, %v1420
        %v1422 = vpop.f32.mrb[0].mxu0
        %1423 = vdwg.mxu0
        %v1424 = vadd.f32 %v1306, %v1406
        %v1425 = vadd.f32 %v1307, %v1411
        %v1426 = vadd.f32 %v1308, %v1416
        %v1427 = vadd.f32 %v1309, %v1421
        %s1428 = scalar_lea.vmem [#allocation3], 192
        %v1429 = vld [vmem:[%s1428] sm:$0xff]
        %v1430 = vld [vmem:[%s1428 + $0x8] sm:$0xff]
        %v1431 = vld [vmem:[%s1428 + $0x10] sm:$0xff]
        %v1432 = vld [vmem:[%s1428 + $0x18] sm:$0xff]
        %1433 = vrot.lane.b32.xlu0 %v709, 122
        %v1434 = vpop.permute.xlu0 %1433
        %1435 = vrot.lane.b32.xlu0 %v710, 122
        %v1436 = vpop.permute.xlu0 %1435
        %1437 = vrot.lane.b32.xlu0 %v711, 122
        %v1438 = vpop.permute.xlu0 %1437
        %1439 = vrot.lane.b32.xlu0 %v712, 122
        %v1440 = vpop.permute.xlu0 %1439
        %v1446 = vsel %vm472, %v1429, 0
        %v1449 = vsel %vm472, %v1430, 0
        %v1452 = vsel %vm472, %v1431, 0
        %v1455 = vsel %vm472, %v1432, 0
        %1457 = vmatprep.subr.mxu0 0.0
        %1458 = vmatpush1.msra.mxu0 %v1434
        %1459 = vmatprep.subr.mxu0 0.0
        %1460 = vmatpush1.msra.mxu0 %v1436
        %1461 = vmatprep.subr.mxu0 0.0
        %1462 = vmatpush1.msra.mxu0 %v1438
        %1463 = vmatprep.subr.mxu0 0.0
        %1464 = vmatpush1.msra.mxu0 %v1440
        %1465 = vmatprep.subr.mxu0 0.0
        %1466 = vmatpush1.msra.mxu0 0.0
        %1467 = vmatprep.subr.mxu0 0.0
        %1468 = vmatpush1.msra.mxu0 0.0
        %1469 = vmatprep.subr.mxu0 0.0
        %1470 = vmatpush1.msra.mxu0 0.0
        %1471 = vmatprep.subr.mxu0 0.0
        %1472 = vmatpush1.msra.mxu0 0.0
        %1473 = vmatprep.subr.mxu0 0.0
        %1474 = vmatpush1.msra.mxu0 0.0
        %1475 = vmatprep.subr.mxu0 0.0
        %1476 = vmatpush1.msra.mxu0 0.0
        %1477 = vmatprep.subr.mxu0 0.0
        %1478 = vmatpush1.msra.mxu0 0.0
        %1479 = vmatprep.subr.mxu0 0.0
        %1480 = vmatpush1.msra.mxu0 0.0
        %1481 = vmatprep.subr.mxu0 0.0
        %1482 = vmatpush1.msra.mxu0 0.0
        %1483 = vmatprep.subr.mxu0 0.0
        %1484 = vmatpush1.msra.mxu0 0.0
        %1485 = vmatprep.subr.mxu0 0.0
        %1486 = vmatpush1.msra.mxu0 0.0
        %1487 = vmatprep.subr.mxu0 0.0
        %1488 = vmatpush1.msra.mxu0 0.0
        %1489 = vmatprep.subr.mxu0 0.0
        %1490 = vmatpush1.msra.mxu0 0.0
        %1491 = vmatprep.subr.mxu0 0.0
        %1492 = vmatpush1.msra.mxu0 0.0
        %1493 = vmatprep.subr.mxu0 0.0
        %1494 = vmatpush1.msra.mxu0 0.0
        %1495 = vmatprep.subr.mxu0 0.0
        %1496 = vmatpush1.msra.mxu0 0.0
        %1497 = vmatprep.subr.mxu0 0.0
        %1498 = vmatpush1.msra.mxu0 0.0
        %1499 = vmatprep.subr.mxu0 0.0
        %1500 = vmatpush1.msra.mxu0 0.0
        %1501 = vmatprep.subr.mxu0 0.0
        %1502 = vmatpush1.msra.mxu0 0.0
        %1503 = vmatprep.subr.mxu0 0.0
        %1504 = vmatpush1.msra.mxu0 0.0
        %1505 = vmatprep.subr.mxu0 0.0
        %1506 = vmatpush1.msra.mxu0 0.0
        %1507 = vmatprep.subr.mxu0 0.0
        %1508 = vmatpush1.msra.mxu0 0.0
        %1509 = vmatprep.subr.mxu0 0.0
        %1510 = vmatpush1.msra.mxu0 0.0
        %1511 = vmatprep.subr.mxu0 0.0
        %1512 = vmatpush1.msra.mxu0 0.0
        %1513 = vmatprep.subr.mxu0 0.0
        %1514 = vmatpush1.msra.mxu0 0.0
        %1515 = vmatprep.subr.mxu0 0.0
        %1516 = vmatpush1.msra.mxu0 0.0
        %1517 = vmatprep.subr.mxu0 0.0
        %1518 = vmatpush1.msra.mxu0 0.0
        %1519 = vmatprep.subr.mxu0 0.0
        %1520 = vmatpush1.msra.mxu0 0.0
        %1521 = vmatprep.mubr.f32.mxu0 0.0
        %1522 = vmatmul.mubr.f32.gmra.mrb[0].mxu0 %v1446
        %v1523 = vpop.f32.mrb[0].mxu0
        %v1524 = vadd.f32 0.0, %v1523
        %v1525 = vpop.f32.mrb[0].mxu0
        %1526 = vmatprep.mubr.f32.mxu0 0.0
        %1527 = vmatmul.mubr.f32.gmra.mrb[0].mxu0 %v1449
        %v1528 = vpop.f32.mrb[0].mxu0
        %v1529 = vadd.f32 0.0, %v1528
        %v1530 = vpop.f32.mrb[0].mxu0
        %1531 = vmatprep.mubr.f32.mxu0 0.0
        %1532 = vmatmul.mubr.f32.gmra.mrb[0].mxu0 %v1452
        %v1533 = vpop.f32.mrb[0].mxu0
        %v1534 = vadd.f32 0.0, %v1533
        %v1535 = vpop.f32.mrb[0].mxu0
        %1536 = vmatprep.mubr.f32.mxu0 0.0
        %1537 = vmatmul.mubr.f32.gmra.mrb[0].mxu0 %v1455
        %v1538 = vpop.f32.mrb[0].mxu0
        %v1539 = vadd.f32 0.0, %v1538
        %v1540 = vpop.f32.mrb[0].mxu0
        %1541 = vdwg.mxu0
        %v1542 = vadd.f32 %v1424, %v1524
        %v1543 = vadd.f32 %v1425, %v1529
        %v1544 = vadd.f32 %v1426, %v1534
        %v1545 = vadd.f32 %v1427, %v1539
        %s1546 = scalar_lea.vmem [#allocation3], 224
        %v1547 = vld [vmem:[%s1546] sm:$0xff]
        %v1548 = vld [vmem:[%s1546 + $0x8] sm:$0xff]
        %v1549 = vld [vmem:[%s1546 + $0x10] sm:$0xff]
        %v1550 = vld [vmem:[%s1546 + $0x18] sm:$0xff]
        %1551 = vrot.lane.b32.xlu0 %v709, 121
        %v1552 = vpop.permute.xlu0 %1551
        %1553 = vrot.lane.b32.xlu0 %v710, 121
        %v1554 = vpop.permute.xlu0 %1553
        %1555 = vrot.lane.b32.xlu0 %v711, 121
        %v1556 = vpop.permute.xlu0 %1555
        %1557 = vrot.lane.b32.xlu0 %v712, 121
        %v1558 = vpop.permute.xlu0 %1557
        %v1564 = vsel %vm472, %v1547, 0
        %v1567 = vsel %vm472, %v1548, 0
        %v1570 = vsel %vm472, %v1549, 0
        %v1573 = vsel %vm472, %v1550, 0
        %1575 = vmatprep.subr.mxu0 0.0
        %1576 = vmatpush1.msra.mxu0 %v1552
        %1577 = vmatprep.subr.mxu0 0.0
        %1578 = vmatpush1.msra.mxu0 %v1554
        %1579 = vmatprep.subr.mxu0 0.0
        %1580 = vmatpush1.msra.mxu0 %v1556
        %1581 = vmatprep.subr.mxu0 0.0
        %1582 = vmatpush1.msra.mxu0 %v1558
        %1583 = vmatprep.subr.mxu0 0.0
        %1584 = vmatpush1.msra.mxu0 0.0
        %1585 = vmatprep.subr.mxu0 0.0
        %1586 = vmatpush1.msra.mxu0 0.0
        %1587 = vmatprep.subr.mxu0 0.0
        %1588 = vmatpush1.msra.mxu0 0.0
        %1589 = vmatprep.subr.mxu0 0.0
        %1590 = vmatpush1.msra.mxu0 0.0
        %1591 = vmatprep.subr.mxu0 0.0
        %1592 = vmatpush1.msra.mxu0 0.0
        %1593 = vmatprep.subr.mxu0 0.0
        %1594 = vmatpush1.msra.mxu0 0.0
        %1595 = vmatprep.subr.mxu0 0.0
        %1596 = vmatpush1.msra.mxu0 0.0
        %1597 = vmatprep.subr.mxu0 0.0
        %1598 = vmatpush1.msra.mxu0 0.0
        %1599 = vmatprep.subr.mxu0 0.0
        %1600 = vmatpush1.msra.mxu0 0.0
        %1601 = vmatprep.subr.mxu0 0.0
        %1602 = vmatpush1.msra.mxu0 0.0
        %1603 = vmatprep.subr.mxu0 0.0
        %1604 = vmatpush1.msra.mxu0 0.0
        %1605 = vmatprep.subr.mxu0 0.0
        %1606 = vmatpush1.msra.mxu0 0.0
        %1607 = vmatprep.subr.mxu0 0.0
        %1608 = vmatpush1.msra.mxu0 0.0
        %1609 = vmatprep.subr.mxu0 0.0
        %1610 = vmatpush1.msra.mxu0 0.0
        %1611 = vmatprep.subr.mxu0 0.0
        %1612 = vmatpush1.msra.mxu0 0.0
        %1613 = vmatprep.subr.mxu0 0.0
        %1614 = vmatpush1.msra.mxu0 0.0
        %1615 = vmatprep.subr.mxu0 0.0
        %1616 = vmatpush1.msra.mxu0 0.0
        %1617 = vmatprep.subr.mxu0 0.0
        %1618 = vmatpush1.msra.mxu0 0.0
        %1619 = vmatprep.subr.mxu0 0.0
        %1620 = vmatpush1.msra.mxu0 0.0
        %1621 = vmatprep.subr.mxu0 0.0
        %1622 = vmatpush1.msra.mxu0 0.0
        %1623 = vmatprep.subr.mxu0 0.0
        %1624 = vmatpush1.msra.mxu0 0.0
        %1625 = vmatprep.subr.mxu0 0.0
        %1626 = vmatpush1.msra.mxu0 0.0
        %1627 = vmatprep.subr.mxu0 0.0
        %1628 = vmatpush1.msra.mxu0 0.0
        %1629 = vmatprep.subr.mxu0 0.0
        %1630 = vmatpush1.msra.mxu0 0.0
        %1631 = vmatprep.subr.mxu0 0.0
        %1632 = vmatpush1.msra.mxu0 0.0
        %1633 = vmatprep.subr.mxu0 0.0
        %1634 = vmatpush1.msra.mxu0 0.0
        %1635 = vmatprep.subr.mxu0 0.0
        %1636 = vmatpush1.msra.mxu0 0.0
        %1637 = vmatprep.subr.mxu0 0.0
        %1638 = vmatpush1.msra.mxu0 0.0
        %1639 = vmatprep.mubr.f32.mxu0 0.0
        %1640 = vmatmul.mubr.f32.gmra.mrb[0].mxu0 %v1564
        %v1641 = vpop.f32.mrb[0].mxu0
        %v1642 = vadd.f32 0.0, %v1641
        %v1643 = vpop.f32.mrb[0].mxu0
        %1644 = vmatprep.mubr.f32.mxu0 0.0
        %1645 = vmatmul.mubr.f32.gmra.mrb[0].mxu0 %v1567
        %v1646 = vpop.f32.mrb[0].mxu0
        %v1647 = vadd.f32 0.0, %v1646
        %v1648 = vpop.f32.mrb[0].mxu0
        %1649 = vmatprep.mubr.f32.mxu0 0.0
        %1650 = vmatmul.mubr.f32.gmra.mrb[0].mxu0 %v1570
        %v1651 = vpop.f32.mrb[0].mxu0
        %v1652 = vadd.f32 0.0, %v1651
        %v1653 = vpop.f32.mrb[0].mxu0
        %1654 = vmatprep.mubr.f32.mxu0 0.0
        %1655 = vmatmul.mubr.f32.gmra.mrb[0].mxu0 %v1573
        %v1656 = vpop.f32.mrb[0].mxu0
        %v1657 = vadd.f32 0.0, %v1656
        %v1658 = vpop.f32.mrb[0].mxu0
        %1659 = vdwg.mxu0
        %v1660 = vadd.f32 %v1542, %v1642
        %v1661 = vadd.f32 %v1543, %v1647
        %v1662 = vadd.f32 %v1544, %v1652
        %v1663 = vadd.f32 %v1545, %v1657
        %s1664 = scalar_lea.vmem [#allocation3], 256
        %v1665 = vld [vmem:[%s1664] sm:$0xff]
        %v1666 = vld [vmem:[%s1664 + $0x8] sm:$0xff]
        %v1667 = vld [vmem:[%s1664 + $0x10] sm:$0xff]
        %v1668 = vld [vmem:[%s1664 + $0x18] sm:$0xff]
        %1669 = vrot.lane.b32.xlu0 %v709, 120
        %v1670 = vpop.permute.xlu0 %1669
        %1671 = vrot.lane.b32.xlu0 %v710, 120
        %v1672 = vpop.permute.xlu0 %1671
        %1673 = vrot.lane.b32.xlu0 %v711, 120
        %v1674 = vpop.permute.xlu0 %1673
        %1675 = vrot.lane.b32.xlu0 %v712, 120
        %v1676 = vpop.permute.xlu0 %1675
        %v1682 = vsel %vm472, %v1665, 0
        %v1685 = vsel %vm472, %v1666, 0
        %v1688 = vsel %vm472, %v1667, 0
        %v1691 = vsel %vm472, %v1668, 0
        %1693 = vmatprep.subr.mxu0 0.0
        %1694 = vmatpush1.msra.mxu0 %v1670
        %1695 = vmatprep.subr.mxu0 0.0
        %1696 = vmatpush1.msra.mxu0 %v1672
        %1697 = vmatprep.subr.mxu0 0.0
        %1698 = vmatpush1.msra.mxu0 %v1674
        %1699 = vmatprep.subr.mxu0 0.0
        %1700 = vmatpush1.msra.mxu0 %v1676
        %1701 = vmatprep.subr.mxu0 0.0
        %1702 = vmatpush1.msra.mxu0 0.0
        %1703 = vmatprep.subr.mxu0 0.0
        %1704 = vmatpush1.msra.mxu0 0.0
        %1705 = vmatprep.subr.mxu0 0.0
        %1706 = vmatpush1.msra.mxu0 0.0
        %1707 = vmatprep.subr.mxu0 0.0
        %1708 = vmatpush1.msra.mxu0 0.0
        %1709 = vmatprep.subr.mxu0 0.0
        %1710 = vmatpush1.msra.mxu0 0.0
        %1711 = vmatprep.subr.mxu0 0.0
        %1712 = vmatpush1.msra.mxu0 0.0
        %1713 = vmatprep.subr.mxu0 0.0
        %1714 = vmatpush1.msra.mxu0 0.0
        %1715 = vmatprep.subr.mxu0 0.0
        %1716 = vmatpush1.msra.mxu0 0.0
        %1717 = vmatprep.subr.mxu0 0.0
        %1718 = vmatpush1.msra.mxu0 0.0
        %1719 = vmatprep.subr.mxu0 0.0
        %1720 = vmatpush1.msra.mxu0 0.0
        %1721 = vmatprep.subr.mxu0 0.0
        %1722 = vmatpush1.msra.mxu0 0.0
        %1723 = vmatprep.subr.mxu0 0.0
        %1724 = vmatpush1.msra.mxu0 0.0
        %1725 = vmatprep.subr.mxu0 0.0
        %1726 = vmatpush1.msra.mxu0 0.0
        %1727 = vmatprep.subr.mxu0 0.0
        %1728 = vmatpush1.msra.mxu0 0.0
        %1729 = vmatprep.subr.mxu0 0.0
        %1730 = vmatpush1.msra.mxu0 0.0
        %1731 = vmatprep.subr.mxu0 0.0
        %1732 = vmatpush1.msra.mxu0 0.0
        %1733 = vmatprep.subr.mxu0 0.0
        %1734 = vmatpush1.msra.mxu0 0.0
        %1735 = vmatprep.subr.mxu0 0.0
        %1736 = vmatpush1.msra.mxu0 0.0
        %1737 = vmatprep.subr.mxu0 0.0
        %1738 = vmatpush1.msra.mxu0 0.0
        %1739 = vmatprep.subr.mxu0 0.0
        %1740 = vmatpush1.msra.mxu0 0.0
        %1741 = vmatprep.subr.mxu0 0.0
        %1742 = vmatpush1.msra.mxu0 0.0
        %1743 = vmatprep.subr.mxu0 0.0
        %1744 = vmatpush1.msra.mxu0 0.0
        %1745 = vmatprep.subr.mxu0 0.0
        %1746 = vmatpush1.msra.mxu0 0.0
        %1747 = vmatprep.subr.mxu0 0.0
        %1748 = vmatpush1.msra.mxu0 0.0
        %1749 = vmatprep.subr.mxu0 0.0
        %1750 = vmatpush1.msra.mxu0 0.0
        %1751 = vmatprep.subr.mxu0 0.0
        %1752 = vmatpush1.msra.mxu0 0.0
        %1753 = vmatprep.subr.mxu0 0.0
        %1754 = vmatpush1.msra.mxu0 0.0
        %1755 = vmatprep.subr.mxu0 0.0
        %1756 = vmatpush1.msra.mxu0 0.0
        %1757 = vmatprep.mubr.f32.mxu0 0.0
        %1758 = vmatmul.mubr.f32.gmra.mrb[0].mxu0 %v1682
        %v1759 = vpop.f32.mrb[0].mxu0
        %v1760 = vadd.f32 0.0, %v1759
        %v1761 = vpop.f32.mrb[0].mxu0
        %1762 = vmatprep.mubr.f32.mxu0 0.0
        %1763 = vmatmul.mubr.f32.gmra.mrb[0].mxu0 %v1685
        %v1764 = vpop.f32.mrb[0].mxu0
        %v1765 = vadd.f32 0.0, %v1764
        %v1766 = vpop.f32.mrb[0].mxu0
        %1767 = vmatprep.mubr.f32.mxu0 0.0
        %1768 = vmatmul.mubr.f32.gmra.mrb[0].mxu0 %v1688
        %v1769 = vpop.f32.mrb[0].mxu0
        %v1770 = vadd.f32 0.0, %v1769
        %v1771 = vpop.f32.mrb[0].mxu0
        %1772 = vmatprep.mubr.f32.mxu0 0.0
        %1773 = vmatmul.mubr.f32.gmra.mrb[0].mxu0 %v1691
        %v1774 = vpop.f32.mrb[0].mxu0
        %v1775 = vadd.f32 0.0, %v1774
        %v1776 = vpop.f32.mrb[0].mxu0
        %1777 = vdwg.mxu0
        %v1778 = vadd.f32 %v1660, %v1760
        %v1779 = vadd.f32 %v1661, %v1765
        %v1780 = vadd.f32 %v1662, %v1770
        %v1781 = vadd.f32 %v1663, %v1775
        %v1782 = vmax.f32 %v1778, 0.0
        %v1783 = vmax.f32 %v1779, 0.0
        %v1784 = vmax.f32 %v1780, 0.0
        %v1785 = vmax.f32 %v1781, 0.0
        %1786 = vst.msk [vmem:[%s259] sm:$0xff] %vm472, %v1782
        %1787 = vst.msk [vmem:[%s259 + $0x8] sm:$0xff] %vm472, %v1783
        %1788 = vst.msk [vmem:[%s259 + $0x10] sm:$0xff] %vm472, %v1784
        %1789 = vst.msk [vmem:[%s259 + $0x18] sm:$0xff] %vm472, %v1785
        %s1790 = sand.u32 %s160, 1
        %s1791 = scalar_lea.sflag [#allocation5], %s1790
        %s1792 = sand.u32 %s160, 1
        %s1793 = smul.addr %s1792, 32
        %s1794 = scalar_lea.vmem [#allocation6], %s1793
        // Predicated region
        $region49: #{tpu_custom_call.1} parent=43 // pred_check
          %p1795 = pneg %p170
        $region50: #{tpu_custom_call.1} parent=43 // pred_check_branch
          %1797 = sbr.rel (%p1795) target = $region52
        $region51: #{tpu_custom_call.1} parent=43 // pred_region
          %s1799 = ssub.s32 512, 512
          %1800 = vsyncadd %s1791, %s1799
          %s1801 = smul.addr %s21, 4
          %s1802 = smul.addr %s1801, 128
          %s1803 = scalar_lea.hbm %s6, %s1802
          %s1804 = sshll.u32 %s1794, 4
          %s1805 = int_to_ptr.vmem [resolvable:$true] %s1804
          %1810 = dma.vmem_to_hbm [thread:$0]  %s1805, 512, %s1803, %s1791, 128, 128, 8
        $region52: #{tpu_custom_call.1} parent=43 // pred_fallthru
          _
      $region44: #{tpu_custom_call.1} parent=5 // pred_fallthru
        _
      %p1811 = scmp.le.s32.totalorder 2, %s16
      // Predicated region
      $region53: #{tpu_custom_call.1} parent=5 // pred_check
        %p1812 = pneg %p1811
      $region54: #{tpu_custom_call.1} parent=5 // pred_check_branch
        %1814 = sbr.rel (%p1812) target = $region56
      $region55: #{tpu_custom_call.1} parent=5 // pred_region
        %s1815 = ssub.s32 %s16, 2
        // Predicated region
        $region57: #{tpu_custom_call.1} parent=55 // pred_check
          %p1816 = pneg %p176
        $region58: #{tpu_custom_call.1} parent=55 // pred_check_branch
          %1818 = sbr.rel (%p1816) target = $region60
        $region59: #{tpu_custom_call.1} parent=55 // pred_region
          %s1819 = sand.u32 %s161, 1
          %s1820 = scalar_lea.sflag [#allocation5], %s1819
          %s1821 = sand.u32 %s161, 1
          %s1822 = smul.addr %s1821, 32
          %s1823 = scalar_lea.vmem [#allocation6], %s1822
          %1824 = dma.done %s1820, 512
        $region60: #{tpu_custom_call.1} parent=55 // pred_fallthru
          _
      $region56: #{tpu_custom_call.1} parent=5 // pred_fallthru
        _
    $region6: #{tpu_custom_call.1} parent=1 // loop_footer
      %s20 = sadd.s32 1, %s16
    $region7: #{tpu_custom_call.1} parent=1 // loop_footer_branch
      %15 = sbr.rel target = $region3
    $region8: #{tpu_custom_call.1} parent=1 // loop_exit
      _
    %1825 = vsyncpa [#allocation4], 1
    %s1826 = scalar_lea.sflag [#allocation4], 1
    %1827 = vsyncpa %s1826, 1
    %1828 = vsyncpa [#allocation5], 1
    %s1829 = scalar_lea.sflag [#allocation5], 1
    %1830 = vsyncpa %s1829, 1

</llo_original>
